<compile_context>
chip_gen: v7x
topology: tpu7x:2x2x1
jax: 0.10.0
libtpu: 0.0.40
codegen_flags: <defaults>
</compile_context>

<pallas_src>
import functools

import jax
import jax.numpy as jnp
from jax import lax
from jax.experimental import pallas as pl
from jax.experimental.pallas import tpu as pltpu


def _idruv_loss_kernel(nb_ref, sb_ref, spm_ref, grad_ref, uvpts_ref, out_ref,
                       *, alpha, decay, pnorm, delD):
    f32 = jnp.float32
    n = f32(nb_ref.shape[1])          # number of rays (object_mask.shape[0])
    s_pts = f32(sb_ref.shape[1])      # number of surface points
    m_pts = f32(uvpts_ref.shape[0])   # number of uv samples

    # ---------------- feature-major row views of the packed N-block ---------
    rgb    = nb_ref[0:3, :]           # (3, N)
    bwdrgb = nb_ref[3:6, :]           # (3, N)
    rgb_gt = nb_ref[6:9, :]           # (3, N)
    sdf    = nb_ref[9:10, :]          # (1, N)
    m_net  = nb_ref[10:11, :]         # (1, N)
    m_obj  = nb_ref[11:12, :]         # (1, N)
    ux0    = nb_ref[12:13, :]         # (1, N)  uv prediction, channel 0
    ux1    = nb_ref[13:14, :]         # (1, N)  uv prediction, channel 1

    m = m_net * m_obj                 # intersection mask, (1, N)
    cnt = jnp.sum(m)
    cnt_safe = jnp.maximum(cnt, 1.0)

    # ---------------- masked L1 rgb losses: sum_{mask}|pred-gt| / N ---------
    rgb_loss = jnp.where(cnt > 0.0, jnp.sum(m * jnp.abs(rgb - rgb_gt)) / n, 0.0)
    rgbcyc_loss = jnp.where(cnt > 0.0, jnp.sum(m * jnp.abs(bwdrgb - rgb_gt)) / n, 0.0)

    # ---------------- mask loss: BCE-with-logits (sum) on ~(net & obj) ------
    mneg = 1.0 - m
    cntneg = jnp.sum(mneg)
    logits = -alpha * sdf
    # stable BCE-with-logits: max(x,0) - x*z + log(1 + exp(-|x|))
    bce = (jnp.maximum(logits, 0.0) - logits * m_obj
           + jnp.log(1.0 + jnp.exp(-jnp.abs(logits))))
    mask_loss = jnp.where(cntneg > 0.0,
                          (1.0 / alpha) * jnp.sum(mneg * bce) / n, 0.0)

    # ---------------- eikonal loss ------------------------------------------
    g = grad_ref[...]                                            # (3, G)
    gnorm = jnp.sqrt(jnp.sum(g * g, axis=0, keepdims=True))      # (1, G)
    eik_loss = jnp.mean((gnorm - 1.0) ** 2)

    # ---------------- uv chamfer regularizer (pure VPU, no MXU) -------------
    # d2[j, i] = ||uv_pts[j] - uv_pred[i]||^2, shape (M, N)
    y0 = uvpts_ref[:, 0:1]                                       # (M, 1)
    y1 = uvpts_ref[:, 1:2]                                       # (M, 1)
    d0 = y0 - ux0
    d1 = y1 - ux1
    d2 = d0 * d0 + d1 * d1                                       # (M, N)
    pred_min = jnp.min(d2, axis=0, keepdims=True)                # (1, N)
    cham_x = jnp.sum(m * pred_min) / cnt_safe                    # mean over masked preds
    pts_min = jnp.min(d2 + (1.0 - m) * 1e10, axis=1, keepdims=True)  # (M, 1)
    cham_y = jnp.sum(pts_min) / m_pts                            # mean over uv samples
    uvr_loss = jnp.where(cnt > 0.0, cham_x + cham_y, 0.0)

    # ---------------- normal smoothness loss (per-channel 2-D tiles) --------
    eps = 1e-6
    d2sum = jnp.zeros((spm_ref.shape[0], sb_ref.shape[1]), f32)  # (S, S)
    for c in range(3):
        dc = spm_ref[:, c:c + 1] - sb_ref[c:c + 1, :] + eps      # (S,1)-(1,S) -> (S,S)
        d2sum = d2sum + dc * dc
    dist = jnp.sqrt(d2sum)                                       # matches (x-y+eps)^2 sum sqrt

    if pnorm == 2:
        n2sum = jnp.zeros_like(d2sum)
        for c in range(3):
            dn = jnp.abs(spm_ref[:, 3 + c:4 + c] - sb_ref[3 + c:4 + c, :]) + eps
            n2sum = n2sum + dn * dn
        npd = jnp.sqrt(n2sum)
    else:
        # integer powers via repeated multiplies (VPU), single pow for 1/p
        psum = jnp.zeros_like(d2sum)
        for c in range(3):
            dn = jnp.abs(spm_ref[:, 3 + c:4 + c] - sb_ref[3 + c:4 + c, :]) + eps
            t = dn
            for _ in range(int(pnorm) - 1):
                t = t * dn
            psum = psum + t
        npd = psum ** (1.0 / float(pnorm))

    if delD is not None:
        dist_w = jnp.where(dist >= delD, jnp.zeros_like(dist), jnp.exp(-decay * dist))
    else:
        dist_w = jnp.exp(-decay * dist)
    normal_loss = jnp.sum(npd * dist_w) / s_pts                  # == mean of row sums

    # ---------------- backward point loss (bwd_mode='l2' -> plain MSE) ------
    diff = sb_ref[6:9, :] - sb_ref[0:3, :]                       # (3, S)
    pt_loss = jnp.mean(diff * diff)

    # ---------------- isometry losses (mode='scisom') -----------------------
    E  = sb_ref[9:10, :]
    Fc = sb_ref[10:11, :]
    G_ = sb_ref[11:12, :]
    L_E = jnp.mean((E - jnp.mean(E)) ** 2)
    L_G = jnp.mean((G_ - jnp.mean(G_)) ** 2)
    L_F = jnp.mean(Fc * Fc)

    # ---------------- pack 10 scalars into lanes 0..9 of one (1,128) store --
    vals = (rgb_loss, mask_loss, eik_loss, uvr_loss, normal_loss,
            pt_loss, rgbcyc_loss, L_E, L_G, L_F)
    lane = lax.broadcasted_iota(jnp.int32, (1, 128), 1)
    out = jnp.zeros((1, 128), f32)
    for k, v in enumerate(vals):
        out = jnp.where(lane == k, v, out)
    out_ref[...] = out


def idruv_colmap_loss(model_outputs, ground_truth, cfg):
    """Pallas/JAX equivalent of IDRUVColmapLoss.forward (bwd_mode='l2')."""
    f32 = jnp.float32
    obj_mask = model_outputs["object_mask"]
    n_rays = obj_mask.shape[0]

    rgb_gt = ground_truth["rgb"].reshape(-1, 3).astype(f32)          # (N, 3)
    uv_pts = ground_truth["uv_pts"].reshape(-1, 2).astype(f32)       # (M, 2) point-major

    # --- consolidated, feature-major (lane-dense) input blocks --------------
    nblock = jnp.concatenate([
        model_outputs["rgb_values"].astype(f32).T,                   # rows 0:3
        model_outputs["bwdrgb_values"].astype(f32).T,                # rows 3:6
        rgb_gt.T,                                                    # rows 6:9
        model_outputs["sdf_output"].astype(f32).reshape(1, n_rays),  # row  9
        model_outputs["network_object_mask"].astype(f32).reshape(1, n_rays),  # row 10
        obj_mask.astype(f32).reshape(1, n_rays),                     # row 11
        model_outputs["uv_points"].astype(f32).T,                    # rows 12:14
    ], axis=0)                                                       # (14, N)

    surf = model_outputs["diff_surface_points"].astype(f32)          # (S, 3)
    nrm = model_outputs["diff_normals"].astype(f32)                  # (S, 3)
    uv2s = model_outputs["uv2surface_points"].astype(f32)            # (S, 3)
    fff = model_outputs["diff_props"]["fff"].reshape(-1, 3).astype(f32)  # (S, 3) = [E,F,G]
    sblock = jnp.concatenate([surf.T, nrm.T, uv2s.T, fff.T], axis=0)     # (12, S)
    spm = jnp.concatenate([surf, nrm], axis=1)                       # (S, 6) point-major

    gradt = model_outputs["grad_theta"].astype(f32).T                # (3, G)

    S = surf.shape[0]
    M = uv_pts.shape[0]
    G = gradt.shape[1]

    kernel = functools.partial(
        _idruv_loss_kernel,
        alpha=float(cfg["alpha"]),
        decay=float(cfg["radius"]),
        pnorm=int(cfg["pnorm"]),
        delD=cfg["delD"],
    )

    cost = pl.CostEstimate(
        flops=int(8 * M * n_rays + 30 * S * S + 60 * n_rays + 10 * G),
        transcendentals=int(S * S + n_rays),
        bytes_accessed=int(4 * (14 * n_rays + 12 * S + 6 * S + 3 * G + 2 * M + 128)),
    )

    vmem_spec = pl.BlockSpec(memory_space=pltpu.MemorySpace.VMEM)
    packed = pl.pallas_call(
        kernel,
        out_shape=jax.ShapeDtypeStruct((1, 128), f32),
        in_specs=[vmem_spec] * 5,
        out_specs=vmem_spec,
        cost_estimate=cost,
    )(nblock, sblock, spm, gradt, uv_pts)

    (rgb_loss, mask_loss, eik_loss, uvr_loss, normal_loss,
     pt_loss, rgbcyc_loss, L_E, L_G, L_F) = (packed[0, k] for k in range(10))

    loss = rgb_loss + cfg["eikonal_weight"] * eik_loss + cfg["mask_weight"] * mask_loss
    if cfg["fwd_weight"] > 0.0:
        loss = loss + cfg["fwd_weight"] * uvr_loss
    if cfg["apply_normal_loss"]:
        loss = loss + cfg["normal_weight"] * normal_loss
    # uv2surface_points is not None -> backward point loss (bwd_mode='l2')
    loss = loss + cfg["bwd_weight"] * pt_loss
    if cfg["rgbcyc_weight"] > 0.0:
        loss = loss + cfg["rgbcyc_weight"] * rgbcyc_loss
    iw = cfg["isom_weight"]
    if len(iw) > 0:
        loss = loss + iw[0] * L_E + iw[1] * L_F + iw[2] * L_G

    return {
        "loss": loss,
        "rgb_loss": rgb_loss,
        "eikonal_loss": eik_loss,
        "mask_loss": mask_loss,
        "normal_loss": normal_loss if cfg["apply_normal_loss"] else None,
        "fwd_loss": None,  # matches original: `uv_loss` is never reassigned in forward
        "bwd_loss": pt_loss,
        "rgbcyc_loss": rgbcyc_loss if cfg["rgbcyc_weight"] > 0.0 else None,
        "L_E": L_E,
        "L_F": L_F,
        "L_G": L_G,
    }


if __name__ == "__main__":
    # Deterministic hyper-parameters (module __init__ arguments).
    cfg = dict(
        eikonal_weight=0.1,
        mask_weight=100.0,
        alpha=50.0,
        lipschitz_const=1.0,      # unused in forward
        lipschitz_weight=0.0,     # unused in forward
        lipschitz_points=0,       # unused in forward
        lipschitz_mode="mean",    # unused in forward
        apply_normal_loss=True,
        normal_weight=0.01,
        radius=2.0,
        bwd_weight=1.0,
        pnorm=2,
        delD=0.5,
        rgbcyc_weight=0.1,
        bwd_mode="l2",
        fwd_weight=1.0,
        isom_weight=(1.0, 1.0, 1.0),
        isom_mode="scisom",
    )

    N, G, S, M = 256, 256, 64, 128  # rays, eikonal samples, surface pts, uv samples
    key = jax.random.PRNGKey(0)
    keys = jax.random.split(key, 14)

    normals = jax.random.normal(keys[8], (S, 3), jnp.float32)
    normals = normals / jnp.sqrt(jnp.sum(normals * normals, axis=1, keepdims=True) + 1e-8)
    surf_pts = jax.random.normal(keys[7], (S, 3), jnp.float32)

    model_outputs = {
        "rgb_values": jax.random.uniform(keys[0], (N, 3), jnp.float32),
        "bwdrgb_values": jax.random.uniform(keys[1], (N, 3), jnp.float32),
        "sdf_output": 0.1 * jax.random.normal(keys[2], (N, 1), jnp.float32),
        "network_object_mask": jax.random.bernoulli(keys[3], 0.7, (N,)),
        "object_mask": jax.random.bernoulli(keys[4], 0.7, (N,)),
        "grad_theta": jax.random.normal(keys[5], (G, 3), jnp.float32),
        "uv_points": jax.random.uniform(keys[6], (N, 2), jnp.float32),
        "diff_surface_points": surf_pts,
        "diff_normals": normals,
        "uv2surface_points": surf_pts + 0.05 * jax.random.normal(keys[9], (S, 3), jnp.float32),
        "diff_props": {"fff": 1.0 + 0.1 * jax.random.normal(keys[10], (S, 1, 3), jnp.float32)},
    }
    ground_truth = {
        "rgb": jax.random.uniform(keys[11], (1, N, 3), jnp.float32),
        "uv_pts": jax.random.uniform(keys[12], (1, M, 2), jnp.float32),
        "tex": jax.random.uniform(keys[13], (1, 3, 16, 16), jnp.float32),  # unused by forward
        "imp_map": jnp.ones((1, N), jnp.float32),                          # unused (bwd_mode='l2')
    }
    # TODO(synk): bwd_mode='wl2' (dynamic masked gather of imp_map weights) and the
    # unused-in-forward uvrgb/grid_sample path are not implemented; the reference
    # forward with bwd_mode='l2' does not require them.

    out = idruv_colmap_loss(model_outputs, ground_truth, cfg)
    out = jax.block_until_ready(out)
    assert bool(jnp.isfinite(out["loss"])), "non-finite total loss"
    print("KERNEL_OK")
</pallas_src>

<mosaic_0001>
module attributes {stable_mosaic.version = 11 : i64} {
  func.func @_idruv_loss_kernel(%arg0: memref<14x256xf32, #tpu.memory_space<vmem>>, %arg1: memref<12x64xf32, #tpu.memory_space<vmem>>, %arg2: memref<64x6xf32, #tpu.memory_space<vmem>>, %arg3: memref<3x256xf32, #tpu.memory_space<vmem>>, %arg4: memref<128x2xf32, #tpu.memory_space<vmem>>, %arg5: memref<1x128xf32, #tpu.memory_space<vmem>>) attributes {dimension_semantics = [], scalar_prefetch = 0 : i64, scratch_operands = 0 : i64, tpu.core_type = #tpu.core_type<tc>} {
    %c0 = arith.constant 0 : index
    %c0_0 = arith.constant 0 : index
    %0 = vector.load %arg0[%c0, %c0_0] : memref<14x256xf32, #tpu.memory_space<vmem>>, vector<3x256xf32>
    %c3 = arith.constant 3 : index
    %c0_1 = arith.constant 0 : index
    %1 = vector.load %arg0[%c3, %c0_1] : memref<14x256xf32, #tpu.memory_space<vmem>>, vector<3x256xf32>
    %c6 = arith.constant 6 : index
    %c0_2 = arith.constant 0 : index
    %2 = vector.load %arg0[%c6, %c0_2] : memref<14x256xf32, #tpu.memory_space<vmem>>, vector<3x256xf32>
    %c9 = arith.constant 9 : index
    %c0_3 = arith.constant 0 : index
    %3 = vector.load %arg0[%c9, %c0_3] : memref<14x256xf32, #tpu.memory_space<vmem>>, vector<1x256xf32>
    %c10 = arith.constant 10 : index
    %c0_4 = arith.constant 0 : index
    %4 = vector.load %arg0[%c10, %c0_4] : memref<14x256xf32, #tpu.memory_space<vmem>>, vector<1x256xf32>
    %c11 = arith.constant 11 : index
    %c0_5 = arith.constant 0 : index
    %5 = vector.load %arg0[%c11, %c0_5] : memref<14x256xf32, #tpu.memory_space<vmem>>, vector<1x256xf32>
    %c12 = arith.constant 12 : index
    %c0_6 = arith.constant 0 : index
    %6 = vector.load %arg0[%c12, %c0_6] : memref<14x256xf32, #tpu.memory_space<vmem>>, vector<1x256xf32>
    %c13 = arith.constant 13 : index
    %c0_7 = arith.constant 0 : index
    %7 = vector.load %arg0[%c13, %c0_7] : memref<14x256xf32, #tpu.memory_space<vmem>>, vector<1x256xf32>
    %8 = arith.mulf %4, %5 : vector<1x256xf32>
    %9 = vector.shape_cast %8 : vector<1x256xf32> to vector<1x1x256xf32>
    %cst = arith.constant dense<0.000000e+00> : vector<1xf32>
    %10 = vector.multi_reduction <add>, %9, %cst [1, 2] : vector<1x1x256xf32> to vector<1xf32>
    %11 = vector.shape_cast %10 : vector<1xf32> to vector<1x1x1xf32>
    %12 = vector.extract %11[0, 0, 0] : f32 from vector<1x1x1xf32>
    %cst_8 = arith.constant 1.000000e+00 : f32
    %13 = arith.maximumf %12, %cst_8 : f32
    %cst_9 = arith.constant 0.000000e+00 : f32
    %14 = arith.cmpf ogt, %12, %cst_9 : f32
    %15 = arith.subf %0, %2 : vector<3x256xf32>
    %16 = math.absf %15 : vector<3x256xf32>
    %17 = vector.broadcast %8 : vector<1x256xf32> to vector<3x256xf32>
    %18 = arith.mulf %17, %16 : vector<3x256xf32>
    %19 = vector.shape_cast %18 : vector<3x256xf32> to vector<1x3x256xf32>
    %cst_10 = arith.constant dense<0.000000e+00> : vector<1xf32>
    %20 = vector.multi_reduction <add>, %19, %cst_10 [1, 2] : vector<1x3x256xf32> to vector<1xf32>
    %21 = vector.shape_cast %20 : vector<1xf32> to vector<1x1x1xf32>
    %22 = vector.extract %21[0, 0, 0] : f32 from vector<1x1x1xf32>
    %cst_11 = arith.constant 2.560000e+02 : f32
    %23 = arith.divf %22, %cst_11 : f32
    %cst_12 = arith.constant 0.000000e+00 : f32
    %24 = arith.select %14, %23, %cst_12 : f32
    %cst_13 = arith.constant 0.000000e+00 : f32
    %25 = arith.cmpf ogt, %12, %cst_13 : f32
    %26 = arith.subf %1, %2 : vector<3x256xf32>
    %27 = math.absf %26 : vector<3x256xf32>
    %28 = vector.broadcast %8 : vector<1x256xf32> to vector<3x256xf32>
    %29 = arith.mulf %28, %27 : vector<3x256xf32>
    %30 = vector.shape_cast %29 : vector<3x256xf32> to vector<1x3x256xf32>
    %cst_14 = arith.constant dense<0.000000e+00> : vector<1xf32>
    %31 = vector.multi_reduction <add>, %30, %cst_14 [1, 2] : vector<1x3x256xf32> to vector<1xf32>
    %32 = vector.shape_cast %31 : vector<1xf32> to vector<1x1x1xf32>
    %33 = vector.extract %32[0, 0, 0] : f32 from vector<1x1x1xf32>
    %cst_15 = arith.constant 2.560000e+02 : f32
    %34 = arith.divf %33, %cst_15 : f32
    %cst_16 = arith.constant 0.000000e+00 : f32
    %35 = arith.select %25, %34, %cst_16 : f32
    %cst_17 = arith.constant 1.000000e+00 : f32
    %36 = vector.broadcast %cst_17 : f32 to vector<1x256xf32>
    %37 = arith.subf %36, %8 : vector<1x256xf32>
    %38 = vector.shape_cast %37 : vector<1x256xf32> to vector<1x1x256xf32>
    %cst_18 = arith.constant dense<0.000000e+00> : vector<1xf32>
    %39 = vector.multi_reduction <add>, %38, %cst_18 [1, 2] : vector<1x1x256xf32> to vector<1xf32>
    %40 = vector.shape_cast %39 : vector<1xf32> to vector<1x1x1xf32>
    %41 = vector.extract %40[0, 0, 0] : f32 from vector<1x1x1xf32>
    %cst_19 = arith.constant -5.000000e+01 : f32
    %42 = vector.broadcast %cst_19 : f32 to vector<1x256xf32>
    %43 = arith.mulf %42, %3 : vector<1x256xf32>
    %cst_20 = arith.constant 0.000000e+00 : f32
    %44 = vector.broadcast %cst_20 : f32 to vector<1x256xf32>
    %45 = arith.maximumf %43, %44 : vector<1x256xf32>
    %46 = arith.mulf %43, %5 : vector<1x256xf32>
    %47 = arith.subf %45, %46 : vector<1x256xf32>
    %48 = math.absf %43 : vector<1x256xf32>
    %cst_21 = arith.constant 0.000000e+00 : f32
    %49 = vector.broadcast %cst_21 : f32 to vector<1x256xf32>
    %50 = arith.subf %49, %48 : vector<1x256xf32>
    %51 = math.exp %50 : vector<1x256xf32>
    %cst_22 = arith.constant 1.000000e+00 : f32
    %52 = vector.broadcast %cst_22 : f32 to vector<1x256xf32>
    %53 = arith.addf %52, %51 : vector<1x256xf32>
    %54 = math.log %53 : vector<1x256xf32>
    %55 = arith.addf %47, %54 : vector<1x256xf32>
    %cst_23 = arith.constant 0.000000e+00 : f32
    %56 = arith.cmpf ogt, %41, %cst_23 : f32
    %57 = arith.mulf %37, %55 : vector<1x256xf32>
    %58 = vector.shape_cast %57 : vector<1x256xf32> to vector<1x1x256xf32>
    %cst_24 = arith.constant dense<0.000000e+00> : vector<1xf32>
    %59 = vector.multi_reduction <add>, %58, %cst_24 [1, 2] : vector<1x1x256xf32> to vector<1xf32>
    %60 = vector.shape_cast %59 : vector<1xf32> to vector<1x1x1xf32>
    %61 = vector.extract %60[0, 0, 0] : f32 from vector<1x1x1xf32>
    %cst_25 = arith.constant 2.000000e-02 : f32
    %62 = arith.mulf %cst_25, %61 : f32
    %cst_26 = arith.constant 2.560000e+02 : f32
    %63 = arith.divf %62, %cst_26 : f32
    %cst_27 = arith.constant 0.000000e+00 : f32
    %64 = arith.select %56, %63, %cst_27 : f32
    %c0_28 = arith.constant 0 : index
    %c0_29 = arith.constant 0 : index
    %65 = vector.load %arg3[%c0_28, %c0_29] : memref<3x256xf32, #tpu.memory_space<vmem>>, vector<3x256xf32>
    %66 = arith.mulf %65, %65 : vector<3x256xf32>
    %cst_30 = arith.constant dense<0.000000e+00> : vector<256xf32>
    %67 = vector.multi_reduction <add>, %66, %cst_30 [0] : vector<3x256xf32> to vector<256xf32>
    %68 = vector.shape_cast %67 : vector<256xf32> to vector<1x256xf32>
    %69 = math.sqrt %68 : vector<1x256xf32>
    %cst_31 = arith.constant 1.000000e+00 : f32
    %70 = vector.broadcast %cst_31 : f32 to vector<1x256xf32>
    %71 = arith.subf %69, %70 : vector<1x256xf32>
    %72 = arith.mulf %71, %71 : vector<1x256xf32>
    %73 = vector.shape_cast %72 : vector<1x256xf32> to vector<1x1x256xf32>
    %cst_32 = arith.constant dense<0.000000e+00> : vector<1xf32>
    %74 = vector.multi_reduction <add>, %73, %cst_32 [1, 2] : vector<1x1x256xf32> to vector<1xf32>
    %75 = vector.shape_cast %74 : vector<1xf32> to vector<1x1x1xf32>
    %76 = vector.extract %75[0, 0, 0] : f32 from vector<1x1x1xf32>
    %cst_33 = arith.constant 2.560000e+02 : f32
    %77 = arith.divf %76, %cst_33 : f32
    %c0_34 = arith.constant 0 : index
    %c0_35 = arith.constant 0 : index
    %78 = vector.load %arg4[%c0_34, %c0_35] : memref<128x2xf32, #tpu.memory_space<vmem>>, vector<128x1xf32>
    %c0_36 = arith.constant 0 : index
    %c1 = arith.constant 1 : index
    %79 = vector.load %arg4[%c0_36, %c1] : memref<128x2xf32, #tpu.memory_space<vmem>>, vector<128x1xf32>
    %80 = vector.broadcast %78 : vector<128x1xf32> to vector<128x256xf32>
    %81 = vector.broadcast %6 : vector<1x256xf32> to vector<128x256xf32>
    %82 = arith.subf %80, %81 : vector<128x256xf32>
    %83 = vector.broadcast %79 : vector<128x1xf32> to vector<128x256xf32>
    %84 = vector.broadcast %7 : vector<1x256xf32> to vector<128x256xf32>
    %85 = arith.subf %83, %84 : vector<128x256xf32>
    %86 = arith.mulf %82, %82 : vector<128x256xf32>
    %87 = arith.mulf %85, %85 : vector<128x256xf32>
    %88 = arith.addf %86, %87 : vector<128x256xf32>
    %cst_37 = arith.constant dense<0x7F800000> : vector<256xf32>
    %89 = vector.multi_reduction <minimumf>, %88, %cst_37 [0] : vector<128x256xf32> to vector<256xf32>
    %90 = vector.shape_cast %89 : vector<256xf32> to vector<1x256xf32>
    %91 = arith.mulf %8, %90 : vector<1x256xf32>
    %92 = vector.shape_cast %91 : vector<1x256xf32> to vector<1x1x256xf32>
    %cst_38 = arith.constant dense<0.000000e+00> : vector<1xf32>
    %93 = vector.multi_reduction <add>, %92, %cst_38 [1, 2] : vector<1x1x256xf32> to vector<1xf32>
    %94 = vector.shape_cast %93 : vector<1xf32> to vector<1x1x1xf32>
    %95 = vector.extract %94[0, 0, 0] : f32 from vector<1x1x1xf32>
    %96 = arith.divf %95, %13 : f32
    %cst_39 = arith.constant 1.000000e+00 : f32
    %97 = vector.broadcast %cst_39 : f32 to vector<1x256xf32>
    %98 = arith.subf %97, %8 : vector<1x256xf32>
    %cst_40 = arith.constant 1.000000e+10 : f32
    %99 = vector.broadcast %cst_40 : f32 to vector<1x256xf32>
    %100 = arith.mulf %98, %99 : vector<1x256xf32>
    %101 = vector.broadcast %100 : vector<1x256xf32> to vector<128x256xf32>
    %102 = arith.addf %88, %101 : vector<128x256xf32>
    %cst_41 = arith.constant dense<0x7F800000> : vector<128xf32>
    %103 = vector.multi_reduction <minimumf>, %102, %cst_41 [1] : vector<128x256xf32> to vector<128xf32>
    %104 = vector.shape_cast %103 : vector<128xf32> to vector<128x1xf32>
    %105 = vector.shape_cast %104 : vector<128x1xf32> to vector<1x128x1xf32>
    %cst_42 = arith.constant dense<0.000000e+00> : vector<1xf32>
    %106 = vector.multi_reduction <add>, %105, %cst_42 [1, 2] : vector<1x128x1xf32> to vector<1xf32>
    %107 = vector.shape_cast %106 : vector<1xf32> to vector<1x1x1xf32>
    %108 = vector.extract %107[0, 0, 0] : f32 from vector<1x1x1xf32>
    %cst_43 = arith.constant 1.280000e+02 : f32
    %109 = arith.divf %108, %cst_43 : f32
    %cst_44 = arith.constant 0.000000e+00 : f32
    %110 = arith.cmpf ogt, %12, %cst_44 : f32
    %111 = arith.addf %96, %109 : f32
    %cst_45 = arith.constant 0.000000e+00 : f32
    %112 = arith.select %110, %111, %cst_45 : f32
    %cst_46 = arith.constant 0.000000e+00 : f32
    %113 = vector.broadcast %cst_46 : f32 to vector<64x64xf32>
    %c0_47 = arith.constant 0 : index
    %c0_48 = arith.constant 0 : index
    %114 = vector.load %arg2[%c0_47, %c0_48] : memref<64x6xf32, #tpu.memory_space<vmem>>, vector<64x1xf32>
    %c0_49 = arith.constant 0 : index
    %c0_50 = arith.constant 0 : index
    %115 = vector.load %arg1[%c0_49, %c0_50] : memref<12x64xf32, #tpu.memory_space<vmem>>, vector<1x64xf32>
    %116 = vector.broadcast %114 : vector<64x1xf32> to vector<64x64xf32>
    %117 = vector.broadcast %115 : vector<1x64xf32> to vector<64x64xf32>
    %118 = arith.subf %116, %117 : vector<64x64xf32>
    %cst_51 = arith.constant 9.99999997E-7 : f32
    %119 = vector.broadcast %cst_51 : f32 to vector<64x64xf32>
    %120 = arith.addf %118, %119 : vector<64x64xf32>
    %121 = arith.mulf %120, %120 : vector<64x64xf32>
    %122 = arith.addf %113, %121 : vector<64x64xf32>
    %c0_52 = arith.constant 0 : index
    %c1_53 = arith.constant 1 : index
    %123 = vector.load %arg2[%c0_52, %c1_53] : memref<64x6xf32, #tpu.memory_space<vmem>>, vector<64x1xf32>
    %c1_54 = arith.constant 1 : index
    %c0_55 = arith.constant 0 : index
    %124 = vector.load %arg1[%c1_54, %c0_55] : memref<12x64xf32, #tpu.memory_space<vmem>>, vector<1x64xf32>
    %125 = vector.broadcast %123 : vector<64x1xf32> to vector<64x64xf32>
    %126 = vector.broadcast %124 : vector<1x64xf32> to vector<64x64xf32>
    %127 = arith.subf %125, %126 : vector<64x64xf32>
    %cst_56 = arith.constant 9.99999997E-7 : f32
    %128 = vector.broadcast %cst_56 : f32 to vector<64x64xf32>
    %129 = arith.addf %127, %128 : vector<64x64xf32>
    %130 = arith.mulf %129, %129 : vector<64x64xf32>
    %131 = arith.addf %122, %130 : vector<64x64xf32>
    %c0_57 = arith.constant 0 : index
    %c2 = arith.constant 2 : index
    %132 = vector.load %arg2[%c0_57, %c2] : memref<64x6xf32, #tpu.memory_space<vmem>>, vector<64x1xf32>
    %c2_58 = arith.constant 2 : index
    %c0_59 = arith.constant 0 : index
    %133 = vector.load %arg1[%c2_58, %c0_59] : memref<12x64xf32, #tpu.memory_space<vmem>>, vector<1x64xf32>
    %134 = vector.broadcast %132 : vector<64x1xf32> to vector<64x64xf32>
    %135 = vector.broadcast %133 : vector<1x64xf32> to vector<64x64xf32>
    %136 = arith.subf %134, %135 : vector<64x64xf32>
    %cst_60 = arith.constant 9.99999997E-7 : f32
    %137 = vector.broadcast %cst_60 : f32 to vector<64x64xf32>
    %138 = arith.addf %136, %137 : vector<64x64xf32>
    %139 = arith.mulf %138, %138 : vector<64x64xf32>
    %140 = arith.addf %131, %139 : vector<64x64xf32>
    %141 = math.sqrt %140 : vector<64x64xf32>
    %cst_61 = arith.constant 0.000000e+00 : f32
    %142 = vector.broadcast %cst_61 : f32 to vector<64x64xf32>
    %c0_62 = arith.constant 0 : index
    %c3_63 = arith.constant 3 : index
    %143 = vector.load %arg2[%c0_62, %c3_63] : memref<64x6xf32, #tpu.memory_space<vmem>>, vector<64x1xf32>
    %c3_64 = arith.constant 3 : index
    %c0_65 = arith.constant 0 : index
    %144 = vector.load %arg1[%c3_64, %c0_65] : memref<12x64xf32, #tpu.memory_space<vmem>>, vector<1x64xf32>
    %145 = vector.broadcast %143 : vector<64x1xf32> to vector<64x64xf32>
    %146 = vector.broadcast %144 : vector<1x64xf32> to vector<64x64xf32>
    %147 = arith.subf %145, %146 : vector<64x64xf32>
    %148 = math.absf %147 : vector<64x64xf32>
    %cst_66 = arith.constant 9.99999997E-7 : f32
    %149 = vector.broadcast %cst_66 : f32 to vector<64x64xf32>
    %150 = arith.addf %148, %149 : vector<64x64xf32>
    %151 = arith.mulf %150, %150 : vector<64x64xf32>
    %152 = arith.addf %142, %151 : vector<64x64xf32>
    %c0_67 = arith.constant 0 : index
    %c4 = arith.constant 4 : index
    %153 = vector.load %arg2[%c0_67, %c4] : memref<64x6xf32, #tpu.memory_space<vmem>>, vector<64x1xf32>
    %c4_68 = arith.constant 4 : index
    %c0_69 = arith.constant 0 : index
    %154 = vector.load %arg1[%c4_68, %c0_69] : memref<12x64xf32, #tpu.memory_space<vmem>>, vector<1x64xf32>
    %155 = vector.broadcast %153 : vector<64x1xf32> to vector<64x64xf32>
    %156 = vector.broadcast %154 : vector<1x64xf32> to vector<64x64xf32>
    %157 = arith.subf %155, %156 : vector<64x64xf32>
    %158 = math.absf %157 : vector<64x64xf32>
    %cst_70 = arith.constant 9.99999997E-7 : f32
    %159 = vector.broadcast %cst_70 : f32 to vector<64x64xf32>
    %160 = arith.addf %158, %159 : vector<64x64xf32>
    %161 = arith.mulf %160, %160 : vector<64x64xf32>
    %162 = arith.addf %152, %161 : vector<64x64xf32>
    %c0_71 = arith.constant 0 : index
    %c5 = arith.constant 5 : index
    %163 = vector.load %arg2[%c0_71, %c5] : memref<64x6xf32, #tpu.memory_space<vmem>>, vector<64x1xf32>
    %c5_72 = arith.constant 5 : index
    %c0_73 = arith.constant 0 : index
    %164 = vector.load %arg1[%c5_72, %c0_73] : memref<12x64xf32, #tpu.memory_space<vmem>>, vector<1x64xf32>
    %165 = vector.broadcast %163 : vector<64x1xf32> to vector<64x64xf32>
    %166 = vector.broadcast %164 : vector<1x64xf32> to vector<64x64xf32>
    %167 = arith.subf %165, %166 : vector<64x64xf32>
    %168 = math.absf %167 : vector<64x64xf32>
    %cst_74 = arith.constant 9.99999997E-7 : f32
    %169 = vector.broadcast %cst_74 : f32 to vector<64x64xf32>
    %170 = arith.addf %168, %169 : vector<64x64xf32>
    %171 = arith.mulf %170, %170 : vector<64x64xf32>
    %172 = arith.addf %162, %171 : vector<64x64xf32>
    %173 = math.sqrt %172 : vector<64x64xf32>
    %cst_75 = arith.constant 5.000000e-01 : f32
    %174 = vector.broadcast %cst_75 : f32 to vector<64x64xf32>
    %175 = arith.cmpf oge, %141, %174 : vector<64x64xf32>
    %cst_76 = arith.constant 0.000000e+00 : f32
    %176 = vector.broadcast %cst_76 : f32 to vector<64x64xf32>
    %cst_77 = arith.constant -2.000000e+00 : f32
    %177 = vector.broadcast %cst_77 : f32 to vector<64x64xf32>
    %178 = arith.mulf %177, %141 : vector<64x64xf32>
    %179 = math.exp %178 : vector<64x64xf32>
    %180 = arith.select %175, %176, %179 : vector<64x64xi1>, vector<64x64xf32>
    %181 = arith.mulf %173, %180 : vector<64x64xf32>
    %182 = vector.shape_cast %181 : vector<64x64xf32> to vector<1x64x64xf32>
    %cst_78 = arith.constant dense<0.000000e+00> : vector<1xf32>
    %183 = vector.multi_reduction <add>, %182, %cst_78 [1, 2] : vector<1x64x64xf32> to vector<1xf32>
    %184 = vector.shape_cast %183 : vector<1xf32> to vector<1x1x1xf32>
    %185 = vector.extract %184[0, 0, 0] : f32 from vector<1x1x1xf32>
    %cst_79 = arith.constant 6.400000e+01 : f32
    %186 = arith.divf %185, %cst_79 : f32
    %c6_80 = arith.constant 6 : index
    %c0_81 = arith.constant 0 : index
    %187 = vector.load %arg1[%c6_80, %c0_81] : memref<12x64xf32, #tpu.memory_space<vmem>>, vector<3x64xf32>
    %c0_82 = arith.constant 0 : index
    %c0_83 = arith.constant 0 : index
    %188 = vector.load %arg1[%c0_82, %c0_83] : memref<12x64xf32, #tpu.memory_space<vmem>>, vector<3x64xf32>
    %189 = arith.subf %187, %188 : vector<3x64xf32>
    %190 = arith.mulf %189, %189 : vector<3x64xf32>
    %191 = vector.shape_cast %190 : vector<3x64xf32> to vector<1x3x64xf32>
    %cst_84 = arith.constant dense<0.000000e+00> : vector<1xf32>
    %192 = vector.multi_reduction <add>, %191, %cst_84 [1, 2] : vector<1x3x64xf32> to vector<1xf32>
    %193 = vector.shape_cast %192 : vector<1xf32> to vector<1x1x1xf32>
    %194 = vector.extract %193[0, 0, 0] : f32 from vector<1x1x1xf32>
    %cst_85 = arith.constant 1.920000e+02 : f32
    %195 = arith.divf %194, %cst_85 : f32
    %c9_86 = arith.constant 9 : index
    %c0_87 = arith.constant 0 : index
    %196 = vector.load %arg1[%c9_86, %c0_87] : memref<12x64xf32, #tpu.memory_space<vmem>>, vector<1x64xf32>
    %c10_88 = arith.constant 10 : index
    %c0_89 = arith.constant 0 : index
    %197 = vector.load %arg1[%c10_88, %c0_89] : memref<12x64xf32, #tpu.memory_space<vmem>>, vector<1x64xf32>
    %c11_90 = arith.constant 11 : index
    %c0_91 = arith.constant 0 : index
    %198 = vector.load %arg1[%c11_90, %c0_91] : memref<12x64xf32, #tpu.memory_space<vmem>>, vector<1x64xf32>
    %199 = vector.shape_cast %196 : vector<1x64xf32> to vector<1x1x64xf32>
    %cst_92 = arith.constant dense<0.000000e+00> : vector<1xf32>
    %200 = vector.multi_reduction <add>, %199, %cst_92 [1, 2] : vector<1x1x64xf32> to vector<1xf32>
    %201 = vector.shape_cast %200 : vector<1xf32> to vector<1x1x1xf32>
    %202 = vector.extract %201[0, 0, 0] : f32 from vector<1x1x1xf32>
    %cst_93 = arith.constant 6.400000e+01 : f32
    %203 = arith.divf %202, %cst_93 : f32
    %204 = vector.broadcast %203 : f32 to vector<1x64xf32>
    %205 = arith.subf %196, %204 : vector<1x64xf32>
    %206 = arith.mulf %205, %205 : vector<1x64xf32>
    %207 = vector.shape_cast %206 : vector<1x64xf32> to vector<1x1x64xf32>
    %cst_94 = arith.constant dense<0.000000e+00> : vector<1xf32>
    %208 = vector.multi_reduction <add>, %207, %cst_94 [1, 2] : vector<1x1x64xf32> to vector<1xf32>
    %209 = vector.shape_cast %208 : vector<1xf32> to vector<1x1x1xf32>
    %210 = vector.extract %209[0, 0, 0] : f32 from vector<1x1x1xf32>
    %cst_95 = arith.constant 6.400000e+01 : f32
    %211 = arith.divf %210, %cst_95 : f32
    %212 = vector.shape_cast %198 : vector<1x64xf32> to vector<1x1x64xf32>
    %cst_96 = arith.constant dense<0.000000e+00> : vector<1xf32>
    %213 = vector.multi_reduction <add>, %212, %cst_96 [1, 2] : vector<1x1x64xf32> to vector<1xf32>
    %214 = vector.shape_cast %213 : vector<1xf32> to vector<1x1x1xf32>
    %215 = vector.extract %214[0, 0, 0] : f32 from vector<1x1x1xf32>
    %cst_97 = arith.constant 6.400000e+01 : f32
    %216 = arith.divf %215, %cst_97 : f32
    %217 = vector.broadcast %216 : f32 to vector<1x64xf32>
    %218 = arith.subf %198, %217 : vector<1x64xf32>
    %219 = arith.mulf %218, %218 : vector<1x64xf32>
    %220 = vector.shape_cast %219 : vector<1x64xf32> to vector<1x1x64xf32>
    %cst_98 = arith.constant dense<0.000000e+00> : vector<1xf32>
    %221 = vector.multi_reduction <add>, %220, %cst_98 [1, 2] : vector<1x1x64xf32> to vector<1xf32>
    %222 = vector.shape_cast %221 : vector<1xf32> to vector<1x1x1xf32>
    %223 = vector.extract %222[0, 0, 0] : f32 from vector<1x1x1xf32>
    %cst_99 = arith.constant 6.400000e+01 : f32
    %224 = arith.divf %223, %cst_99 : f32
    %225 = arith.mulf %197, %197 : vector<1x64xf32>
    %226 = vector.shape_cast %225 : vector<1x64xf32> to vector<1x1x64xf32>
    %cst_100 = arith.constant dense<0.000000e+00> : vector<1xf32>
    %227 = vector.multi_reduction <add>, %226, %cst_100 [1, 2] : vector<1x1x64xf32> to vector<1xf32>
    %228 = vector.shape_cast %227 : vector<1xf32> to vector<1x1x1xf32>
    %229 = vector.extract %228[0, 0, 0] : f32 from vector<1x1x1xf32>
    %cst_101 = arith.constant 6.400000e+01 : f32
    %230 = arith.divf %229, %cst_101 : f32
    %231 = tpu.iota {dimensions = array<i32: 1>} : vector<1x128xi32>
    %cst_102 = arith.constant 0.000000e+00 : f32
    %232 = vector.broadcast %cst_102 : f32 to vector<1x128xf32>
    %c0_i32 = arith.constant 0 : i32
    %233 = vector.broadcast %c0_i32 : i32 to vector<1x128xi32>
    %234 = arith.cmpi eq, %231, %233 : vector<1x128xi32>
    %235 = vector.broadcast %24 : f32 to vector<1x128xf32>
    %236 = arith.select %234, %235, %232 : vector<1x128xi1>, vector<1x128xf32>
    %c1_i32 = arith.constant 1 : i32
    %237 = vector.broadcast %c1_i32 : i32 to vector<1x128xi32>
    %238 = arith.cmpi eq, %231, %237 : vector<1x128xi32>
    %239 = vector.broadcast %64 : f32 to vector<1x128xf32>
    %240 = arith.select %238, %239, %236 : vector<1x128xi1>, vector<1x128xf32>
    %c2_i32 = arith.constant 2 : i32
    %241 = vector.broadcast %c2_i32 : i32 to vector<1x128xi32>
    %242 = arith.cmpi eq, %231, %241 : vector<1x128xi32>
    %243 = vector.broadcast %77 : f32 to vector<1x128xf32>
    %244 = arith.select %242, %243, %240 : vector<1x128xi1>, vector<1x128xf32>
    %c3_i32 = arith.constant 3 : i32
    %245 = vector.broadcast %c3_i32 : i32 to vector<1x128xi32>
    %246 = arith.cmpi eq, %231, %245 : vector<1x128xi32>
    %247 = vector.broadcast %112 : f32 to vector<1x128xf32>
    %248 = arith.select %246, %247, %244 : vector<1x128xi1>, vector<1x128xf32>
    %c4_i32 = arith.constant 4 : i32
    %249 = vector.broadcast %c4_i32 : i32 to vector<1x128xi32>
    %250 = arith.cmpi eq, %231, %249 : vector<1x128xi32>
    %251 = vector.broadcast %186 : f32 to vector<1x128xf32>
    %252 = arith.select %250, %251, %248 : vector<1x128xi1>, vector<1x128xf32>
    %c5_i32 = arith.constant 5 : i32
    %253 = vector.broadcast %c5_i32 : i32 to vector<1x128xi32>
    %254 = arith.cmpi eq, %231, %253 : vector<1x128xi32>
    %255 = vector.broadcast %195 : f32 to vector<1x128xf32>
    %256 = arith.select %254, %255, %252 : vector<1x128xi1>, vector<1x128xf32>
    %c6_i32 = arith.constant 6 : i32
    %257 = vector.broadcast %c6_i32 : i32 to vector<1x128xi32>
    %258 = arith.cmpi eq, %231, %257 : vector<1x128xi32>
    %259 = vector.broadcast %35 : f32 to vector<1x128xf32>
    %260 = arith.select %258, %259, %256 : vector<1x128xi1>, vector<1x128xf32>
    %c7_i32 = arith.constant 7 : i32
    %261 = vector.broadcast %c7_i32 : i32 to vector<1x128xi32>
    %262 = arith.cmpi eq, %231, %261 : vector<1x128xi32>
    %263 = vector.broadcast %211 : f32 to vector<1x128xf32>
    %264 = arith.select %262, %263, %260 : vector<1x128xi1>, vector<1x128xf32>
    %c8_i32 = arith.constant 8 : i32
    %265 = vector.broadcast %c8_i32 : i32 to vector<1x128xi32>
    %266 = arith.cmpi eq, %231, %265 : vector<1x128xi32>
    %267 = vector.broadcast %224 : f32 to vector<1x128xf32>
    %268 = arith.select %266, %267, %264 : vector<1x128xi1>, vector<1x128xf32>
    %c9_i32 = arith.constant 9 : i32
    %269 = vector.broadcast %c9_i32 : i32 to vector<1x128xi32>
    %270 = arith.cmpi eq, %231, %269 : vector<1x128xi32>
    %271 = vector.broadcast %230 : f32 to vector<1x128xf32>
    %272 = arith.select %270, %271, %268 : vector<1x128xi1>, vector<1x128xf32>
    %c0_103 = arith.constant 0 : index
    %c0_104 = arith.constant 0 : index
    %273 = vector.load %arg5[%c0_103, %c0_104] : memref<1x128xf32, #tpu.memory_space<vmem>>, vector<1x128xf32>
    tpu.vector_store %arg5[%c0_103, %c0_104], %272 {strides = array<i32>} : memref<1x128xf32, #tpu.memory_space<vmem>>, vector<1x128xf32>,
    return
  }
}

</mosaic_0001>

<llo_original>
// kernel: tpu_custom_call.1
$region0: #{tpu_custom_call.1}
  #allocation0 [shape = 'u32[]', space=smem, size = 0x4, offset = 0x4, fixed_abs, tag = 'smem constant byte address 0x4 - core index']
  #allocation1 [shape = 'u32[144,128]{1,0:T(1,128)}', space=vmem, size = 0x12000, scoped, tag = 'internal scratch']
  %s0 = inlined_call_operand.vmem [shape: f32[14,256], index: 0, kind: input, shape index: {}]
  %s1 = inlined_call_operand.vmem [shape: f32[12,64], index: 1, kind: input, shape index: {}]
  %s2 = inlined_call_operand.vmem [shape: f32[64,6], index: 2, kind: input, shape index: {}]
  %s3 = inlined_call_operand.vmem [shape: f32[3,256], index: 3, kind: input, shape index: {}]
  %s4 = inlined_call_operand.vmem [shape: f32[128,2], index: 4, kind: input, shape index: {}]
  %s5 = inlined_call_operand.hbm [shape: f32[1,128], index: 5, kind: output, shape index: {}]
  %s6 = sld [smem:[#allocation0]]
  $region30: #{tpu_custom_call.1} parent=0
    _
  %s8 = ssub.s32 1, %s6
  %s9 = scalar_select 0, %s8, %s6
  $region1: #{tpu_custom_call.1} parent=0
    #allocation2 [shape = 'u8[512]{0}', space=vmem, size = 0x400, scoped, tag = 'output window, operand 0, single buffered']
    #allocation3 [shape = 's32[1]{0}', space=sflag, size = 0x4, scoped, tag = 'scoped memory for tpu_custom_call.1']
    %10 = vsyncpa [#allocation3], 0
    // Predicated region
    $region2: #{tpu_custom_call.1} parent=1 // pred_check
      _
    $region3: #{tpu_custom_call.1} parent=1 // pred_check_branch
      %12 = sbr.rel (0) target = $region5
    $region4: #{tpu_custom_call.1} parent=1 // pred_region
      _
    $region5: #{tpu_custom_call.1} parent=1 // pred_fallthru
      _
    // Predicated region
    $region6: #{tpu_custom_call.1} parent=1 // pred_check
      _
    $region7: #{tpu_custom_call.1} parent=1 // pred_check_branch
      %14 = sbr.rel (0) target = $region9
    $region8: #{tpu_custom_call.1} parent=1 // pred_region
      _
    $region9: #{tpu_custom_call.1} parent=1 // pred_fallthru
      _
    // Predicated region
    $region10: #{tpu_custom_call.1} parent=1 // pred_check
      _
    $region11: #{tpu_custom_call.1} parent=1 // pred_check_branch
      %16 = sbr.rel (0) target = $region13
    $region12: #{tpu_custom_call.1} parent=1 // pred_region
      _
    $region13: #{tpu_custom_call.1} parent=1 // pred_fallthru
      _
    // Predicated region
    $region14: #{tpu_custom_call.1} parent=1 // pred_check
      _
    $region15: #{tpu_custom_call.1} parent=1 // pred_check_branch
      %18 = sbr.rel (0) target = $region17
    $region16: #{tpu_custom_call.1} parent=1 // pred_region
      _
    $region17: #{tpu_custom_call.1} parent=1 // pred_fallthru
      _
    // Predicated region
    $region18: #{tpu_custom_call.1} parent=1 // pred_check
      _
    $region19: #{tpu_custom_call.1} parent=1 // pred_check_branch
      %20 = sbr.rel (0) target = $region21
    $region20: #{tpu_custom_call.1} parent=1 // pred_region
      _
    $region21: #{tpu_custom_call.1} parent=1 // pred_fallthru
      _
    %v21 = vld [vmem:[%s0] sm:$0x7]
    %v22 = vld [vmem:[%s0 + $0x8] sm:$0x7]
    %v23 = vld [vmem:[%s0] sm:$0x38]
    %v24 = vld [vmem:[%s0 + $0x8] sm:$0x38]
    %v25 = vld [vmem:[%s0] sm:$0xc0]
    %v26 = vld [vmem:[%s0 + $0x8] sm:$0xc0]
    %v27 = vld [vmem:[%s0 + $0x10] sm:$0x1]
    %v28 = vld [vmem:[%s0 + $0x18] sm:$0x1]
    %s29 = scalar_lea.vmem %s0, 17
    %v30 = vld [vmem:[%s29] ss:$8 sm:$0x3]
    %s31 = scalar_lea.vmem %s0, 18
    %v32 = vld [vmem:[%s31] ss:$8 sm:$0x3]
    %s33 = scalar_lea.vmem %s0, 19
    %v34 = vld [vmem:[%s33] ss:$8 sm:$0x3]
    %s35 = scalar_lea.vmem %s0, 20
    %v36 = vld [vmem:[%s35] ss:$8 sm:$0x3]
    %s37 = scalar_lea.vmem %s0, 21
    %v38 = vld [vmem:[%s37] ss:$8 sm:$0x3]
    %v39 = vmul.f32 %v32, %v34
    %v41 = vlaneseq
    %v42 = vshrl.u32 %v41, 7
    %v43 = vsub.s32 0, %v42
    %v44 = vrot.slane %v39, %v43
    %v45 = vlaneseq
    %v46 = vshrl.u32 %v45, 7
    %v47 = vsub.s32 1, %v46
    %v48 = vrot.slane %v39, %v47
    %vm51 = vcmask 1040384
    %v52 = vsel %vm51, %v44, 0.0
    %v53 = vsel %vm51, %v48, 0.0
    %v54 = vadd.f32 %v52, %v53
    %55 = vadd.xlane.f32.xlu0 %v54
    %v56 = vpop.xlane.xlu0 %55
    %v57 = vrot.slane %v56, 4
    %v58 = vadd.f32 %v56, %v57
    %v59 = vrot.slane %v58, 2
    %v60 = vadd.f32 %v58, %v59
    %v61 = vrot.slane %v60, 1
    %v62 = vadd.f32 %v60, %v61
    %s63 = vtos %v62
    %s64 = smax.f32 %s63, 1.0
    %p65 = scmp.gt.f32.partialorder %s63, 0.0
    %vm70 = vcmask 1041408
    %v71 = vrot.slane %v25, 6
    %v72 = vrot.slane %v27, 6
    %v73 = vsel %vm70, %v71, %v72
    %v74 = vrot.slane %v26, 6
    %v75 = vrot.slane %v28, 6
    %v76 = vsel %vm70, %v74, %v75
    %v79 = vsub.f32 %v21, %v73
    %v80 = vsub.f32 %v22, %v76
    %v81 = vand.u32 2147483647, %v79
    %v82 = vand.u32 2147483647, %v80
    %v83 = vmul.f32 %v44, %v81
    %v84 = vmul.f32 %v48, %v82
    %vm85 = vcmask 1042432
    %v86 = vsel %vm85, %v83, 0.0
    %v87 = vsel %vm85, %v84, 0.0
    %v88 = vadd.f32 %v86, %v87
    %89 = vadd.xlane.f32.xlu0 %v88
    %v90 = vpop.xlane.xlu0 %89
    %v91 = vrot.slane %v90, 4
    %v92 = vadd.f32 %v90, %v91
    %v93 = vrot.slane %v92, 2
    %v94 = vadd.f32 %v92, %v93
    %v95 = vrot.slane %v94, 1
    %v96 = vadd.f32 %v94, %v95
    %s97 = vtos %v96
    %v98 = vrcp.pop 256.0
    %s99 = vtos %v98
    %s100 = smul.f32 %s97, %s99
    %s101 = scalar_select %p65, %s100, 0.0
    %vm102 = vcmask 1044480
    %v103 = vrot.slane %v25, 3
    %v104 = vrot.slane %v27, 3
    %v105 = vsel %vm102, %v103, %v104
    %v106 = vrot.slane %v26, 3
    %v107 = vrot.slane %v28, 3
    %v108 = vsel %vm102, %v106, %v107
    %v111 = vsub.f32 %v23, %v105
    %v112 = vsub.f32 %v24, %v108
    %v113 = vand.u32 2147483647, %v111
    %v114 = vand.u32 2147483647, %v112
    %v115 = vmul.f32 %v44, %v113
    %v116 = vmul.f32 %v48, %v114
    %v119 = vrot.slane %v115, 3
    %v120 = vrot.slane %v116, 3
    %v123 = vsel %vm85, %v119, 0.0
    %v124 = vsel %vm85, %v120, 0.0
    %v125 = vadd.f32 %v123, %v124
    %126 = vadd.xlane.f32.xlu0 %v125
    %v127 = vpop.xlane.xlu0 %126
    %v128 = vrot.slane %v127, 4
    %v129 = vadd.f32 %v127, %v128
    %v130 = vrot.slane %v129, 2
    %v131 = vadd.f32 %v129, %v130
    %v132 = vrot.slane %v131, 1
    %v133 = vadd.f32 %v131, %v132
    %s134 = vtos %v133
    %v135 = vrcp.pop 256.0
    %s136 = vtos %v135
    %s137 = smul.f32 %s134, %s136
    %s138 = scalar_select %p65, %s137, 0.0
    %v139 = vsub.f32 1.0, %v39
    %v141 = vlaneseq
    %v142 = vshrl.u32 %v141, 7
    %v143 = vsub.s32 0, %v142
    %v144 = vrot.slane %v139, %v143
    %v145 = vlaneseq
    %v146 = vshrl.u32 %v145, 7
    %v147 = vsub.s32 1, %v146
    %v148 = vrot.slane %v139, %v147
    %v151 = vsel %vm51, %v144, 0.0
    %v152 = vsel %vm51, %v148, 0.0
    %v153 = vadd.f32 %v151, %v152
    %154 = vadd.xlane.f32.xlu0 %v153
    %v155 = vpop.xlane.xlu0 %154
    %v156 = vrot.slane %v155, 4
    %v157 = vadd.f32 %v155, %v156
    %v158 = vrot.slane %v157, 2
    %v159 = vadd.f32 %v157, %v158
    %v160 = vrot.slane %v159, 1
    %v161 = vadd.f32 %v159, %v160
    %s162 = vtos %v161
    %v163 = vmul.f32 %v30, -50.0
    %v164 = vmax.f32 %v163, 0.0
    %v165 = vmul.f32 %v163, %v34
    %v166 = vsub.f32 %v164, %v165
    %v167 = vand.u32 2147483647, %v163
    %v168 = vsub.f32 0.0, %v167
    %v169 = vmul.f32 %v168, 1.442695
    %v170 = vpow.pop %v169
    %v171 = vadd.f32 %v170, 1.0
    %v172 = vlog2.pop %v171
    %v173 = vmul.f32 %v172, 0.6931472
    %v174 = vadd.f32 %v166, %v173
    %p175 = scmp.gt.f32.partialorder %s162, 0.0
    %v176 = vmul.f32 %v139, %v174
    %v178 = vlaneseq
    %v179 = vshrl.u32 %v178, 7
    %v180 = vsub.s32 0, %v179
    %v181 = vrot.slane %v176, %v180
    %v182 = vlaneseq
    %v183 = vshrl.u32 %v182, 7
    %v184 = vsub.s32 1, %v183
    %v185 = vrot.slane %v176, %v184
    %v188 = vsel %vm51, %v181, 0.0
    %v189 = vsel %vm51, %v185, 0.0
    %v190 = vadd.f32 %v188, %v189
    %191 = vadd.xlane.f32.xlu0 %v190
    %v192 = vpop.xlane.xlu0 %191
    %v193 = vrot.slane %v192, 4
    %v194 = vadd.f32 %v192, %v193
    %v195 = vrot.slane %v194, 2
    %v196 = vadd.f32 %v194, %v195
    %v197 = vrot.slane %v196, 1
    %v198 = vadd.f32 %v196, %v197
    %s199 = vtos %v198
    %s200 = smul.f32 %s199, 0.02
    %v201 = vrcp.pop 256.0
    %s202 = vtos %v201
    %s203 = smul.f32 %s200, %s202
    %s204 = scalar_select %p175, %s203, 0.0
    %v205 = vld [vmem:[%s3] sm:$0x77]
    %v206 = vmul.f32 %v205, %v205
    %v208 = vcombine.high %v206, %v206
    %v210 = vsel %vm85, %v206, 0.0
    %v211 = vrot.slane %v210, 4
    %v212 = vadd.f32 %v210, %v211
    %v213 = vrot.slane %v212, 2
    %v214 = vadd.f32 %v212, %v213
    %v215 = vrot.slane %v214, 1
    %v216 = vadd.f32 %v214, %v215
    %v217 = vsel %vm85, %v208, 0.0
    %v218 = vrot.slane %v217, 4
    %v219 = vadd.f32 %v217, %v218
    %v220 = vrot.slane %v219, 2
    %v221 = vadd.f32 %v219, %v220
    %v222 = vrot.slane %v221, 1
    %v223 = vadd.f32 %v221, %v222
    %v224 = vrsqrt.pop %v216
    %v225 = vmul.f32 %v216, %v224
    %vm226 = vcmp.eq.f32.partialorder %v216, inf
    %v227 = vsel %vm226, %v216, %v225
    %vm228 = vcmp.eq.f32.partialorder %v216, 0.0
    %v229 = vand.u32 %v216, 2147483648
    %v230 = vsel %vm228, %v229, %v227
    %v231 = vrsqrt.pop %v223
    %v232 = vmul.f32 %v223, %v231
    %vm233 = vcmp.eq.f32.partialorder %v223, inf
    %v234 = vsel %vm233, %v223, %v232
    %vm235 = vcmp.eq.f32.partialorder %v223, 0.0
    %v236 = vand.u32 %v223, 2147483648
    %v237 = vsel %vm235, %v236, %v234
    %v238 = vsub.f32 %v230, 1.0
    %v239 = vsub.f32 %v237, 1.0
    %v240 = vmul.f32 %v238, %v238
    %v241 = vmul.f32 %v239, %v239
    %v242 = vsel %vm51, %v240, 0.0
    %v243 = vsel %vm51, %v241, 0.0
    %v244 = vadd.f32 %v242, %v243
    %245 = vadd.xlane.f32.xlu0 %v244
    %v246 = vpop.xlane.xlu0 %245
    %v247 = vrot.slane %v246, 4
    %v248 = vadd.f32 %v246, %v247
    %v249 = vrot.slane %v248, 2
    %v250 = vadd.f32 %v248, %v249
    %v251 = vrot.slane %v250, 1
    %v252 = vadd.f32 %v250, %v251
    %s253 = vtos %v252
    %v254 = vrcp.pop 256.0
    %s255 = vtos %v254
    %s256 = smul.f32 %s253, %s255
    %v257 = vld [vmem:[%s4] sm:$0xff]
    %v258 = vld [vmem:[%s4 + $0x8] sm:$0xff]
    %v259 = vld [vmem:[%s4 + $0x10] sm:$0xff]
    %v260 = vld [vmem:[%s4 + $0x18] sm:$0xff]
    %v261 = vld [vmem:[%s4 + $0x20] sm:$0xff]
    %v262 = vld [vmem:[%s4 + $0x28] sm:$0xff]
    %v263 = vld [vmem:[%s4 + $0x30] sm:$0xff]
    %v264 = vld [vmem:[%s4 + $0x38] sm:$0xff]
    %v265 = vld [vmem:[%s4 + $0x40] sm:$0xff]
    %v266 = vld [vmem:[%s4 + $0x48] sm:$0xff]
    %v267 = vld [vmem:[%s4 + $0x50] sm:$0xff]
    %v268 = vld [vmem:[%s4 + $0x58] sm:$0xff]
    %v269 = vld [vmem:[%s4 + $0x60] sm:$0xff]
    %v270 = vld [vmem:[%s4 + $0x68] sm:$0xff]
    %v271 = vld [vmem:[%s4 + $0x70] sm:$0xff]
    %v272 = vld [vmem:[%s4 + $0x78] sm:$0xff]
    %274 = vset.pattern.permute.xlu0 0
    %275 = vperm.xlu0 %274, %v257
    %v276 = vpop.permute.xlu0 %275
    %279 = vset.pattern.permute.xlu0 0
    %280 = vperm.xlu0 %279, %v258
    %v281 = vpop.permute.xlu0 %280
    %284 = vset.pattern.permute.xlu0 0
    %285 = vperm.xlu0 %284, %v259
    %v286 = vpop.permute.xlu0 %285
    %289 = vset.pattern.permute.xlu0 0
    %290 = vperm.xlu0 %289, %v260
    %v291 = vpop.permute.xlu0 %290
    %294 = vset.pattern.permute.xlu0 0
    %295 = vperm.xlu0 %294, %v261
    %v296 = vpop.permute.xlu0 %295
    %299 = vset.pattern.permute.xlu0 0
    %300 = vperm.xlu0 %299, %v262
    %v301 = vpop.permute.xlu0 %300
    %304 = vset.pattern.permute.xlu0 0
    %305 = vperm.xlu0 %304, %v263
    %v306 = vpop.permute.xlu0 %305
    %309 = vset.pattern.permute.xlu0 0
    %310 = vperm.xlu0 %309, %v264
    %v311 = vpop.permute.xlu0 %310
    %314 = vset.pattern.permute.xlu0 0
    %315 = vperm.xlu0 %314, %v265
    %v316 = vpop.permute.xlu0 %315
    %319 = vset.pattern.permute.xlu0 0
    %320 = vperm.xlu0 %319, %v266
    %v321 = vpop.permute.xlu0 %320
    %324 = vset.pattern.permute.xlu0 0
    %325 = vperm.xlu0 %324, %v267
    %v326 = vpop.permute.xlu0 %325
    %329 = vset.pattern.permute.xlu0 0
    %330 = vperm.xlu0 %329, %v268
    %v331 = vpop.permute.xlu0 %330
    %334 = vset.pattern.permute.xlu0 0
    %335 = vperm.xlu0 %334, %v269
    %v336 = vpop.permute.xlu0 %335
    %339 = vset.pattern.permute.xlu0 0
    %340 = vperm.xlu0 %339, %v270
    %v341 = vpop.permute.xlu0 %340
    %344 = vset.pattern.permute.xlu0 0
    %345 = vperm.xlu0 %344, %v271
    %v346 = vpop.permute.xlu0 %345
    %349 = vset.pattern.permute.xlu0 0
    %350 = vperm.xlu0 %349, %v272
    %v351 = vpop.permute.xlu0 %350
    %v354 = vlaneseq
    %v355 = vshrl.u32 %v354, 7
    %v356 = vsub.s32 0, %v355
    %v357 = vrot.slane %v36, %v356
    %v358 = vlaneseq
    %v359 = vshrl.u32 %v358, 7
    %v360 = vsub.s32 1, %v359
    %v361 = vrot.slane %v36, %v360
    %v364 = vsub.f32 %v276, %v357
    %v365 = vsub.f32 %v276, %v361
    %v366 = vsub.f32 %v281, %v357
    %v367 = vsub.f32 %v281, %v361
    %v368 = vsub.f32 %v286, %v357
    %v369 = vsub.f32 %v286, %v361
    %v370 = vsub.f32 %v291, %v357
    %v371 = vsub.f32 %v291, %v361
    %v372 = vsub.f32 %v296, %v357
    %v373 = vsub.f32 %v296, %v361
    %v374 = vsub.f32 %v301, %v357
    %v375 = vsub.f32 %v301, %v361
    %v376 = vsub.f32 %v306, %v357
    %v377 = vsub.f32 %v306, %v361
    %v378 = vsub.f32 %v311, %v357
    %v379 = vsub.f32 %v311, %v361
    %v380 = vsub.f32 %v316, %v357
    %v381 = vsub.f32 %v316, %v361
    %v382 = vsub.f32 %v321, %v357
    %v383 = vsub.f32 %v321, %v361
    %v384 = vsub.f32 %v326, %v357
    %v385 = vsub.f32 %v326, %v361
    %v386 = vsub.f32 %v331, %v357
    %v387 = vsub.f32 %v331, %v361
    %v388 = vsub.f32 %v336, %v357
    %v389 = vsub.f32 %v336, %v361
    %v390 = vsub.f32 %v341, %v357
    %v391 = vsub.f32 %v341, %v361
    %v392 = vsub.f32 %v346, %v357
    %v393 = vsub.f32 %v346, %v361
    %v394 = vsub.f32 %v351, %v357
    %v395 = vsub.f32 %v351, %v361
    %396 = vset.pattern.permute.xlu0 1
    %397 = vperm.xlu0 %396, %v257
    %v398 = vpop.permute.xlu0 %397
    %400 = vset.pattern.permute.xlu0 1
    %401 = vperm.xlu0 %400, %v258
    %v402 = vpop.permute.xlu0 %401
    %404 = vset.pattern.permute.xlu0 1
    %405 = vperm.xlu0 %404, %v259
    %v406 = vpop.permute.xlu0 %405
    %408 = vset.pattern.permute.xlu0 1
    %409 = vperm.xlu0 %408, %v260
    %v410 = vpop.permute.xlu0 %409
    %412 = vset.pattern.permute.xlu0 1
    %413 = vperm.xlu0 %412, %v261
    %v414 = vpop.permute.xlu0 %413
    %416 = vset.pattern.permute.xlu0 1
    %417 = vperm.xlu0 %416, %v262
    %v418 = vpop.permute.xlu0 %417
    %420 = vset.pattern.permute.xlu0 1
    %421 = vperm.xlu0 %420, %v263
    %v422 = vpop.permute.xlu0 %421
    %424 = vset.pattern.permute.xlu0 1
    %425 = vperm.xlu0 %424, %v264
    %v426 = vpop.permute.xlu0 %425
    %428 = vset.pattern.permute.xlu0 1
    %429 = vperm.xlu0 %428, %v265
    %v430 = vpop.permute.xlu0 %429
    %432 = vset.pattern.permute.xlu0 1
    %433 = vperm.xlu0 %432, %v266
    %v434 = vpop.permute.xlu0 %433
    %436 = vset.pattern.permute.xlu0 1
    %437 = vperm.xlu0 %436, %v267
    %v438 = vpop.permute.xlu0 %437
    %440 = vset.pattern.permute.xlu0 1
    %441 = vperm.xlu0 %440, %v268
    %v442 = vpop.permute.xlu0 %441
    %444 = vset.pattern.permute.xlu0 1
    %445 = vperm.xlu0 %444, %v269
    %v446 = vpop.permute.xlu0 %445
    %448 = vset.pattern.permute.xlu0 1
    %449 = vperm.xlu0 %448, %v270
    %v450 = vpop.permute.xlu0 %449
    %452 = vset.pattern.permute.xlu0 1
    %453 = vperm.xlu0 %452, %v271
    %v454 = vpop.permute.xlu0 %453
    %456 = vset.pattern.permute.xlu0 1
    %457 = vperm.xlu0 %456, %v272
    %v458 = vpop.permute.xlu0 %457
    %v461 = vlaneseq
    %v462 = vshrl.u32 %v461, 7
    %v463 = vsub.s32 0, %v462
    %v464 = vrot.slane %v38, %v463
    %v465 = vlaneseq
    %v466 = vshrl.u32 %v465, 7
    %v467 = vsub.s32 1, %v466
    %v468 = vrot.slane %v38, %v467
    %v471 = vsub.f32 %v398, %v464
    %v472 = vsub.f32 %v398, %v468
    %v473 = vsub.f32 %v402, %v464
    %v474 = vsub.f32 %v402, %v468
    %v475 = vsub.f32 %v406, %v464
    %v476 = vsub.f32 %v406, %v468
    %v477 = vsub.f32 %v410, %v464
    %v478 = vsub.f32 %v410, %v468
    %v479 = vsub.f32 %v414, %v464
    %v480 = vsub.f32 %v414, %v468
    %v481 = vsub.f32 %v418, %v464
    %v482 = vsub.f32 %v418, %v468
    %v483 = vsub.f32 %v422, %v464
    %v484 = vsub.f32 %v422, %v468
    %v485 = vsub.f32 %v426, %v464
    %v486 = vsub.f32 %v426, %v468
    %v487 = vsub.f32 %v430, %v464
    %v488 = vsub.f32 %v430, %v468
    %v489 = vsub.f32 %v434, %v464
    %v490 = vsub.f32 %v434, %v468
    %v491 = vsub.f32 %v438, %v464
    %v492 = vsub.f32 %v438, %v468
    %v493 = vsub.f32 %v442, %v464
    %v494 = vsub.f32 %v442, %v468
    %v495 = vsub.f32 %v446, %v464
    %v496 = vsub.f32 %v446, %v468
    %v497 = vsub.f32 %v450, %v464
    %v498 = vsub.f32 %v450, %v468
    %v499 = vsub.f32 %v454, %v464
    %v500 = vsub.f32 %v454, %v468
    %v501 = vsub.f32 %v458, %v464
    %v502 = vsub.f32 %v458, %v468
    %v503 = vmul.f32 %v364, %v364
    %v504 = vmul.f32 %v365, %v365
    %v505 = vmul.f32 %v366, %v366
    %v506 = vmul.f32 %v367, %v367
    %v507 = vmul.f32 %v368, %v368
    %v508 = vmul.f32 %v369, %v369
    %v509 = vmul.f32 %v370, %v370
    %v510 = vmul.f32 %v371, %v371
    %v511 = vmul.f32 %v372, %v372
    %v512 = vmul.f32 %v373, %v373
    %v513 = vmul.f32 %v374, %v374
    %v514 = vmul.f32 %v375, %v375
    %v515 = vmul.f32 %v376, %v376
    %v516 = vmul.f32 %v377, %v377
    %v517 = vmul.f32 %v378, %v378
    %v518 = vmul.f32 %v379, %v379
    %v519 = vmul.f32 %v380, %v380
    %v520 = vmul.f32 %v381, %v381
    %v521 = vmul.f32 %v382, %v382
    %v522 = vmul.f32 %v383, %v383
    %v523 = vmul.f32 %v384, %v384
    %v524 = vmul.f32 %v385, %v385
    %v525 = vmul.f32 %v386, %v386
    %v526 = vmul.f32 %v387, %v387
    %v527 = vmul.f32 %v388, %v388
    %v528 = vmul.f32 %v389, %v389
    %v529 = vmul.f32 %v390, %v390
    %v530 = vmul.f32 %v391, %v391
    %v531 = vmul.f32 %v392, %v392
    %v532 = vmul.f32 %v393, %v393
    %v533 = vmul.f32 %v394, %v394
    %v534 = vmul.f32 %v395, %v395
    %v535 = vmul.f32 %v471, %v471
    %v536 = vmul.f32 %v472, %v472
    %v537 = vmul.f32 %v473, %v473
    %v538 = vmul.f32 %v474, %v474
    %v539 = vmul.f32 %v475, %v475
    %v540 = vmul.f32 %v476, %v476
    %v541 = vmul.f32 %v477, %v477
    %v542 = vmul.f32 %v478, %v478
    %v543 = vmul.f32 %v479, %v479
    %v544 = vmul.f32 %v480, %v480
    %v545 = vmul.f32 %v481, %v481
    %v546 = vmul.f32 %v482, %v482
    %v547 = vmul.f32 %v483, %v483
    %v548 = vmul.f32 %v484, %v484
    %v549 = vmul.f32 %v485, %v485
    %v550 = vmul.f32 %v486, %v486
    %v551 = vmul.f32 %v487, %v487
    %v552 = vmul.f32 %v488, %v488
    %v553 = vmul.f32 %v489, %v489
    %v554 = vmul.f32 %v490, %v490
    %v555 = vmul.f32 %v491, %v491
    %v556 = vmul.f32 %v492, %v492
    %v557 = vmul.f32 %v493, %v493
    %v558 = vmul.f32 %v494, %v494
    %v559 = vmul.f32 %v495, %v495
    %v560 = vmul.f32 %v496, %v496
    %v561 = vmul.f32 %v497, %v497
    %v562 = vmul.f32 %v498, %v498
    %v563 = vmul.f32 %v499, %v499
    %v564 = vmul.f32 %v500, %v500
    %v565 = vmul.f32 %v501, %v501
    %v566 = vmul.f32 %v502, %v502
    %v567 = vadd.f32 %v503, %v535
    %v568 = vadd.f32 %v504, %v536
    %v569 = vadd.f32 %v505, %v537
    %v570 = vadd.f32 %v506, %v538
    %v571 = vadd.f32 %v507, %v539
    %v572 = vadd.f32 %v508, %v540
    %v573 = vadd.f32 %v509, %v541
    %v574 = vadd.f32 %v510, %v542
    %v575 = vadd.f32 %v511, %v543
    %v576 = vadd.f32 %v512, %v544
    %v577 = vadd.f32 %v513, %v545
    %v578 = vadd.f32 %v514, %v546
    %v579 = vadd.f32 %v515, %v547
    %v580 = vadd.f32 %v516, %v548
    %v581 = vadd.f32 %v517, %v549
    %v582 = vadd.f32 %v518, %v550
    %v583 = vadd.f32 %v519, %v551
    %v584 = vadd.f32 %v520, %v552
    %v585 = vadd.f32 %v521, %v553
    %v586 = vadd.f32 %v522, %v554
    %v587 = vadd.f32 %v523, %v555
    %v588 = vadd.f32 %v524, %v556
    %v589 = vadd.f32 %v525, %v557
    %v590 = vadd.f32 %v526, %v558
    %v591 = vadd.f32 %v527, %v559
    %v592 = vadd.f32 %v528, %v560
    %v593 = vadd.f32 %v529, %v561
    %v594 = vadd.f32 %v530, %v562
    %v595 = vadd.f32 %v531, %v563
    %v596 = vadd.f32 %v532, %v564
    %v597 = vadd.f32 %v533, %v565
    %v598 = vadd.f32 %v534, %v566
    %v599 = vmin.f32 %v567, %v571
    %v600 = vmin.f32 %v569, %v573
    %v601 = vmin.f32 %v599, %v575
    %v602 = vmin.f32 %v600, %v577
    %v603 = vmin.f32 %v601, %v579
    %v604 = vmin.f32 %v602, %v581
    %v605 = vmin.f32 %v603, %v583
    %v606 = vmin.f32 %v604, %v585
    %v607 = vmin.f32 %v605, %v587
    %v608 = vmin.f32 %v606, %v589
    %v609 = vmin.f32 %v607, %v591
    %v610 = vmin.f32 %v608, %v593
    %v611 = vmin.f32 %v609, %v595
    %v612 = vmin.f32 %v610, %v597
    %v613 = vmin.f32 %v611, %v612
    %v614 = vrot.slane %v613, 4
    %v615 = vmin.f32 %v613, %v614
    %v616 = vrot.slane %v615, 2
    %v617 = vmin.f32 %v615, %v616
    %v618 = vrot.slane %v617, 1
    %v619 = vmin.f32 %v617, %v618
    %v620 = vmin.f32 %v568, %v572
    %v621 = vmin.f32 %v570, %v574
    %v622 = vmin.f32 %v620, %v576
    %v623 = vmin.f32 %v621, %v578
    %v624 = vmin.f32 %v622, %v580
    %v625 = vmin.f32 %v623, %v582
    %v626 = vmin.f32 %v624, %v584
    %v627 = vmin.f32 %v625, %v586
    %v628 = vmin.f32 %v626, %v588
    %v629 = vmin.f32 %v627, %v590
    %v630 = vmin.f32 %v628, %v592
    %v631 = vmin.f32 %v629, %v594
    %v632 = vmin.f32 %v630, %v596
    %v633 = vmin.f32 %v631, %v598
    %v634 = vmin.f32 %v632, %v633
    %v635 = vrot.slane %v634, 4
    %v636 = vmin.f32 %v634, %v635
    %v637 = vrot.slane %v636, 2
    %v638 = vmin.f32 %v636, %v637
    %v639 = vrot.slane %v638, 1
    %v640 = vmin.f32 %v638, %v639
    %v643 = vcombine.low %v619, %v640
    %v645 = vunpack.c.l.s4 1966171168
    %v646 = vunpack.c.0.s8 %v645
    %v647 = vlaneseq
    %v648 = vshrl.u32 %v647, 7
    %v649 = vsub.s32 %v646, %v648
    %v650 = vrot.slane %v643, %v649
    %v652 = vunpack.c.l.s4 1966171168
    %v653 = vunpack.c.0.s8 %v652
    %v654 = vlaneseq
    %v655 = vshrl.u32 %v654, 7
    %v656 = vsub.s32 %v653, %v655
    %v657 = vrot.slane %v650, %v656
    %v659 = vmul.f32 %v39, %v657
    %v661 = vlaneseq
    %v662 = vshrl.u32 %v661, 7
    %v663 = vsub.s32 0, %v662
    %v664 = vrot.slane %v659, %v663
    %v665 = vlaneseq
    %v666 = vshrl.u32 %v665, 7
    %v667 = vsub.s32 1, %v666
    %v668 = vrot.slane %v659, %v667
    %v671 = vsel %vm51, %v664, 0.0
    %v672 = vsel %vm51, %v668, 0.0
    %v673 = vadd.f32 %v671, %v672
    %674 = vadd.xlane.f32.xlu0 %v673
    %v675 = vpop.xlane.xlu0 %674
    %v676 = vrot.slane %v675, 4
    %v677 = vadd.f32 %v675, %v676
    %v678 = vrot.slane %v677, 2
    %v679 = vadd.f32 %v677, %v678
    %v680 = vrot.slane %v679, 1
    %v681 = vadd.f32 %v679, %v680
    %s682 = vtos %v681
    %v683 = vstv %s64
    %v684 = vrcp.pop %v683
    %s685 = vtos %v684
    %s686 = smul.f32 %s682, %s685
    %v687 = vmul.f32 %v139, 1e+10
    %v689 = vlaneseq
    %v690 = vshrl.u32 %v689, 7
    %v691 = vsub.s32 0, %v690
    %v692 = vrot.slane %v687, %v691
    %v693 = vlaneseq
    %v694 = vshrl.u32 %v693, 7
    %v695 = vsub.s32 1, %v694
    %v696 = vrot.slane %v687, %v695
    %v699 = vadd.f32 %v567, %v692
    %v700 = vadd.f32 %v568, %v696
    %v701 = vadd.f32 %v569, %v692
    %v702 = vadd.f32 %v570, %v696
    %v703 = vadd.f32 %v571, %v692
    %v704 = vadd.f32 %v572, %v696
    %v705 = vadd.f32 %v573, %v692
    %v706 = vadd.f32 %v574, %v696
    %v707 = vadd.f32 %v575, %v692
    %v708 = vadd.f32 %v576, %v696
    %v709 = vadd.f32 %v577, %v692
    %v710 = vadd.f32 %v578, %v696
    %v711 = vadd.f32 %v579, %v692
    %v712 = vadd.f32 %v580, %v696
    %v713 = vadd.f32 %v581, %v692
    %v714 = vadd.f32 %v582, %v696
    %v715 = vadd.f32 %v583, %v692
    %v716 = vadd.f32 %v584, %v696
    %v717 = vadd.f32 %v585, %v692
    %v718 = vadd.f32 %v586, %v696
    %v719 = vadd.f32 %v587, %v692
    %v720 = vadd.f32 %v588, %v696
    %v721 = vadd.f32 %v589, %v692
    %v722 = vadd.f32 %v590, %v696
    %v723 = vadd.f32 %v591, %v692
    %v724 = vadd.f32 %v592, %v696
    %v725 = vadd.f32 %v593, %v692
    %v726 = vadd.f32 %v594, %v696
    %v727 = vadd.f32 %v595, %v692
    %v728 = vadd.f32 %v596, %v696
    %v729 = vadd.f32 %v597, %v692
    %v730 = vadd.f32 %v598, %v696
    %v731 = vmin.f32 %v699, %v700
    %732 = vmin.xlane.f32.xlu0 %v731
    %v733 = vpop.xlane.xlu0 %732
    %v734 = vmin.f32 %v701, %v702
    %735 = vmin.xlane.f32.xlu0 %v734
    %v736 = vpop.xlane.xlu0 %735
    %v737 = vmin.f32 %v703, %v704
    %738 = vmin.xlane.f32.xlu0 %v737
    %v739 = vpop.xlane.xlu0 %738
    %v740 = vmin.f32 %v705, %v706
    %741 = vmin.xlane.f32.xlu0 %v740
    %v742 = vpop.xlane.xlu0 %741
    %v743 = vmin.f32 %v707, %v708
    %744 = vmin.xlane.f32.xlu0 %v743
    %v745 = vpop.xlane.xlu0 %744
    %v746 = vmin.f32 %v709, %v710
    %747 = vmin.xlane.f32.xlu0 %v746
    %v748 = vpop.xlane.xlu0 %747
    %v749 = vmin.f32 %v711, %v712
    %750 = vmin.xlane.f32.xlu0 %v749
    %v751 = vpop.xlane.xlu0 %750
    %v752 = vmin.f32 %v713, %v714
    %753 = vmin.xlane.f32.xlu0 %v752
    %v754 = vpop.xlane.xlu0 %753
    %v755 = vmin.f32 %v715, %v716
    %756 = vmin.xlane.f32.xlu0 %v755
    %v757 = vpop.xlane.xlu0 %756
    %v758 = vmin.f32 %v717, %v718
    %759 = vmin.xlane.f32.xlu0 %v758
    %v760 = vpop.xlane.xlu0 %759
    %v761 = vmin.f32 %v719, %v720
    %762 = vmin.xlane.f32.xlu0 %v761
    %v763 = vpop.xlane.xlu0 %762
    %v764 = vmin.f32 %v721, %v722
    %765 = vmin.xlane.f32.xlu0 %v764
    %v766 = vpop.xlane.xlu0 %765
    %v767 = vmin.f32 %v723, %v724
    %768 = vmin.xlane.f32.xlu0 %v767
    %v769 = vpop.xlane.xlu0 %768
    %v770 = vmin.f32 %v725, %v726
    %771 = vmin.xlane.f32.xlu0 %v770
    %v772 = vpop.xlane.xlu0 %771
    %v773 = vmin.f32 %v727, %v728
    %774 = vmin.xlane.f32.xlu0 %v773
    %v775 = vpop.xlane.xlu0 %774
    %v776 = vmin.f32 %v729, %v730
    %777 = vmin.xlane.f32.xlu0 %v776
    %v778 = vpop.xlane.xlu0 %777
    %vm779 = vcmask 7168
    %v780 = vsel %vm779, %v733, 0.0
    %v781 = vsel %vm779, %v736, 0.0
    %v782 = vadd.f32 %v780, %v781
    %v783 = vsel %vm779, %v739, 0.0
    %v784 = vadd.f32 %v782, %v783
    %v785 = vsel %vm779, %v742, 0.0
    %v786 = vadd.f32 %v784, %v785
    %v787 = vsel %vm779, %v745, 0.0
    %v788 = vadd.f32 %v786, %v787
    %v789 = vsel %vm779, %v748, 0.0
    %v790 = vadd.f32 %v788, %v789
    %v791 = vsel %vm779, %v751, 0.0
    %v792 = vadd.f32 %v790, %v791
    %v793 = vsel %vm779, %v754, 0.0
    %v794 = vadd.f32 %v792, %v793
    %v795 = vsel %vm779, %v757, 0.0
    %v796 = vadd.f32 %v794, %v795
    %v797 = vsel %vm779, %v760, 0.0
    %v798 = vadd.f32 %v796, %v797
    %v799 = vsel %vm779, %v763, 0.0
    %v800 = vadd.f32 %v798, %v799
    %v801 = vsel %vm779, %v766, 0.0
    %v802 = vadd.f32 %v800, %v801
    %v803 = vsel %vm779, %v769, 0.0
    %v804 = vadd.f32 %v802, %v803
    %v805 = vsel %vm779, %v772, 0.0
    %v806 = vadd.f32 %v804, %v805
    %v807 = vsel %vm779, %v775, 0.0
    %v808 = vadd.f32 %v806, %v807
    %v809 = vsel %vm779, %v778, 0.0
    %v810 = vadd.f32 %v808, %v809
    %811 = vadd.xlane.f32.xlu0 %v810
    %v812 = vpop.xlane.xlu0 %811
    %v813 = vrot.slane %v812, 4
    %v814 = vadd.f32 %v812, %v813
    %v815 = vrot.slane %v814, 2
    %v816 = vadd.f32 %v814, %v815
    %v817 = vrot.slane %v816, 1
    %v818 = vadd.f32 %v816, %v817
    %s819 = vtos %v818
    %v820 = vrcp.pop 128.0
    %s821 = vtos %v820
    %s822 = smul.f32 %s819, %s821
    %s823 = sadd.f32 %s686, %s822
    %s824 = scalar_select %p65, %s823, 0.0
    %v825 = vld [vmem:[%s2] sm:$0xff]
    %v826 = vld [vmem:[%s2 + $0x8] sm:$0xff]
    %v827 = vld [vmem:[%s2 + $0x10] sm:$0xff]
    %v828 = vld [vmem:[%s2 + $0x18] sm:$0xff]
    %v829 = vld [vmem:[%s2 + $0x20] sm:$0xff]
    %v830 = vld [vmem:[%s2 + $0x28] sm:$0xff]
    %v831 = vld [vmem:[%s2 + $0x30] sm:$0xff]
    %v832 = vld [vmem:[%s2 + $0x38] sm:$0xff]
    %v833 = vld [vmem:[%s1] sm:$0x1]
    %835 = vset.pattern.permute.xlu0 0
    %836 = vperm.xlu0 %835, %v825
    %v837 = vpop.permute.xlu0 %836
    %840 = vset.pattern.permute.xlu0 0
    %841 = vperm.xlu0 %840, %v826
    %v842 = vpop.permute.xlu0 %841
    %845 = vset.pattern.permute.xlu0 0
    %846 = vperm.xlu0 %845, %v827
    %v847 = vpop.permute.xlu0 %846
    %850 = vset.pattern.permute.xlu0 0
    %851 = vperm.xlu0 %850, %v828
    %v852 = vpop.permute.xlu0 %851
    %855 = vset.pattern.permute.xlu0 0
    %856 = vperm.xlu0 %855, %v829
    %v857 = vpop.permute.xlu0 %856
    %860 = vset.pattern.permute.xlu0 0
    %861 = vperm.xlu0 %860, %v830
    %v862 = vpop.permute.xlu0 %861
    %865 = vset.pattern.permute.xlu0 0
    %866 = vperm.xlu0 %865, %v831
    %v867 = vpop.permute.xlu0 %866
    %870 = vset.pattern.permute.xlu0 0
    %871 = vperm.xlu0 %870, %v832
    %v872 = vpop.permute.xlu0 %871
    %v874 = vlaneseq
    %v875 = vshrl.u32 %v874, 7
    %v876 = vsub.s32 0, %v875
    %v877 = vrot.slane %v833, %v876
    %v878 = vsub.f32 %v837, %v877
    %v879 = vsub.f32 %v842, %v877
    %v880 = vsub.f32 %v847, %v877
    %v881 = vsub.f32 %v852, %v877
    %v882 = vsub.f32 %v857, %v877
    %v883 = vsub.f32 %v862, %v877
    %v884 = vsub.f32 %v867, %v877
    %v885 = vsub.f32 %v872, %v877
    %v886 = vadd.f32 %v878, 1e-06
    %v887 = vadd.f32 %v879, 1e-06
    %v888 = vadd.f32 %v880, 1e-06
    %v889 = vadd.f32 %v881, 1e-06
    %v890 = vadd.f32 %v882, 1e-06
    %v891 = vadd.f32 %v883, 1e-06
    %v892 = vadd.f32 %v884, 1e-06
    %v893 = vadd.f32 %v885, 1e-06
    %v894 = vmul.f32 %v886, %v886
    %v895 = vmul.f32 %v887, %v887
    %v896 = vmul.f32 %v888, %v888
    %v897 = vmul.f32 %v889, %v889
    %v898 = vmul.f32 %v890, %v890
    %v899 = vmul.f32 %v891, %v891
    %v900 = vmul.f32 %v892, %v892
    %v901 = vmul.f32 %v893, %v893
    %v902 = vadd.f32 %v894, 0.0
    %v903 = vadd.f32 %v895, 0.0
    %v904 = vadd.f32 %v896, 0.0
    %v905 = vadd.f32 %v897, 0.0
    %v906 = vadd.f32 %v898, 0.0
    %v907 = vadd.f32 %v899, 0.0
    %v908 = vadd.f32 %v900, 0.0
    %v909 = vadd.f32 %v901, 0.0
    %v910 = vld [vmem:[%s1 + $0x1] sm:$0x1]
    %911 = vset.pattern.permute.xlu0 1
    %912 = vperm.xlu0 %911, %v825
    %v913 = vpop.permute.xlu0 %912
    %915 = vset.pattern.permute.xlu0 1
    %916 = vperm.xlu0 %915, %v826
    %v917 = vpop.permute.xlu0 %916
    %919 = vset.pattern.permute.xlu0 1
    %920 = vperm.xlu0 %919, %v827
    %v921 = vpop.permute.xlu0 %920
    %923 = vset.pattern.permute.xlu0 1
    %924 = vperm.xlu0 %923, %v828
    %v925 = vpop.permute.xlu0 %924
    %927 = vset.pattern.permute.xlu0 1
    %928 = vperm.xlu0 %927, %v829
    %v929 = vpop.permute.xlu0 %928
    %931 = vset.pattern.permute.xlu0 1
    %932 = vperm.xlu0 %931, %v830
    %v933 = vpop.permute.xlu0 %932
    %935 = vset.pattern.permute.xlu0 1
    %936 = vperm.xlu0 %935, %v831
    %v937 = vpop.permute.xlu0 %936
    %939 = vset.pattern.permute.xlu0 1
    %940 = vperm.xlu0 %939, %v832
    %v941 = vpop.permute.xlu0 %940
    %v943 = vlaneseq
    %v944 = vshrl.u32 %v943, 7
    %v945 = vsub.s32 0, %v944
    %v946 = vrot.slane %v910, %v945
    %v947 = vsub.f32 %v913, %v946
    %v948 = vsub.f32 %v917, %v946
    %v949 = vsub.f32 %v921, %v946
    %v950 = vsub.f32 %v925, %v946
    %v951 = vsub.f32 %v929, %v946
    %v952 = vsub.f32 %v933, %v946
    %v953 = vsub.f32 %v937, %v946
    %v954 = vsub.f32 %v941, %v946
    %v955 = vadd.f32 %v947, 1e-06
    %v956 = vadd.f32 %v948, 1e-06
    %v957 = vadd.f32 %v949, 1e-06
    %v958 = vadd.f32 %v950, 1e-06
    %v959 = vadd.f32 %v951, 1e-06
    %v960 = vadd.f32 %v952, 1e-06
    %v961 = vadd.f32 %v953, 1e-06
    %v962 = vadd.f32 %v954, 1e-06
    %v963 = vmul.f32 %v955, %v955
    %v964 = vmul.f32 %v956, %v956
    %v965 = vmul.f32 %v957, %v957
    %v966 = vmul.f32 %v958, %v958
    %v967 = vmul.f32 %v959, %v959
    %v968 = vmul.f32 %v960, %v960
    %v969 = vmul.f32 %v961, %v961
    %v970 = vmul.f32 %v962, %v962
    %v971 = vadd.f32 %v902, %v963
    %v972 = vadd.f32 %v903, %v964
    %v973 = vadd.f32 %v904, %v965
    %v974 = vadd.f32 %v905, %v966
    %v975 = vadd.f32 %v906, %v967
    %v976 = vadd.f32 %v907, %v968
    %v977 = vadd.f32 %v908, %v969
    %v978 = vadd.f32 %v909, %v970
    %v979 = vld [vmem:[%s1 + $0x2] sm:$0x1]
    %980 = vset.pattern.permute.xlu0 2
    %981 = vperm.xlu0 %980, %v825
    %v982 = vpop.permute.xlu0 %981
    %984 = vset.pattern.permute.xlu0 2
    %985 = vperm.xlu0 %984, %v826
    %v986 = vpop.permute.xlu0 %985
    %988 = vset.pattern.permute.xlu0 2
    %989 = vperm.xlu0 %988, %v827
    %v990 = vpop.permute.xlu0 %989
    %992 = vset.pattern.permute.xlu0 2
    %993 = vperm.xlu0 %992, %v828
    %v994 = vpop.permute.xlu0 %993
    %996 = vset.pattern.permute.xlu0 2
    %997 = vperm.xlu0 %996, %v829
    %v998 = vpop.permute.xlu0 %997
    %1000 = vset.pattern.permute.xlu0 2
    %1001 = vperm.xlu0 %1000, %v830
    %v1002 = vpop.permute.xlu0 %1001
    %1004 = vset.pattern.permute.xlu0 2
    %1005 = vperm.xlu0 %1004, %v831
    %v1006 = vpop.permute.xlu0 %1005
    %1008 = vset.pattern.permute.xlu0 2
    %1009 = vperm.xlu0 %1008, %v832
    %v1010 = vpop.permute.xlu0 %1009
    %v1012 = vlaneseq
    %v1013 = vshrl.u32 %v1012, 7
    %v1014 = vsub.s32 0, %v1013
    %v1015 = vrot.slane %v979, %v1014
    %v1016 = vsub.f32 %v982, %v1015
    %v1017 = vsub.f32 %v986, %v1015
    %v1018 = vsub.f32 %v990, %v1015
    %v1019 = vsub.f32 %v994, %v1015
    %v1020 = vsub.f32 %v998, %v1015
    %v1021 = vsub.f32 %v1002, %v1015
    %v1022 = vsub.f32 %v1006, %v1015
    %v1023 = vsub.f32 %v1010, %v1015
    %v1024 = vadd.f32 %v1016, 1e-06
    %v1025 = vadd.f32 %v1017, 1e-06
    %v1026 = vadd.f32 %v1018, 1e-06
    %v1027 = vadd.f32 %v1019, 1e-06
    %v1028 = vadd.f32 %v1020, 1e-06
    %v1029 = vadd.f32 %v1021, 1e-06
    %v1030 = vadd.f32 %v1022, 1e-06
    %v1031 = vadd.f32 %v1023, 1e-06
    %v1032 = vmul.f32 %v1024, %v1024
    %v1033 = vmul.f32 %v1025, %v1025
    %v1034 = vmul.f32 %v1026, %v1026
    %v1035 = vmul.f32 %v1027, %v1027
    %v1036 = vmul.f32 %v1028, %v1028
    %v1037 = vmul.f32 %v1029, %v1029
    %v1038 = vmul.f32 %v1030, %v1030
    %v1039 = vmul.f32 %v1031, %v1031
    %v1040 = vadd.f32 %v971, %v1032
    %v1041 = vadd.f32 %v972, %v1033
    %v1042 = vadd.f32 %v973, %v1034
    %v1043 = vadd.f32 %v974, %v1035
    %v1044 = vadd.f32 %v975, %v1036
    %v1045 = vadd.f32 %v976, %v1037
    %v1046 = vadd.f32 %v977, %v1038
    %v1047 = vadd.f32 %v978, %v1039
    %v1048 = vrsqrt.pop %v1040
    %v1049 = vmul.f32 %v1040, %v1048
    %vm1050 = vcmp.eq.f32.partialorder %v1040, inf
    %v1051 = vsel %vm1050, %v1040, %v1049
    %vm1052 = vcmp.eq.f32.partialorder %v1040, 0.0
    %v1053 = vand.u32 %v1040, 2147483648
    %v1054 = vsel %vm1052, %v1053, %v1051
    %v1055 = vrsqrt.pop %v1041
    %v1056 = vmul.f32 %v1041, %v1055
    %vm1057 = vcmp.eq.f32.partialorder %v1041, inf
    %v1058 = vsel %vm1057, %v1041, %v1056
    %vm1059 = vcmp.eq.f32.partialorder %v1041, 0.0
    %v1060 = vand.u32 %v1041, 2147483648
    %v1061 = vsel %vm1059, %v1060, %v1058
    %v1062 = vrsqrt.pop %v1042
    %v1063 = vmul.f32 %v1042, %v1062
    %vm1064 = vcmp.eq.f32.partialorder %v1042, inf
    %v1065 = vsel %vm1064, %v1042, %v1063
    %vm1066 = vcmp.eq.f32.partialorder %v1042, 0.0
    %v1067 = vand.u32 %v1042, 2147483648
    %v1068 = vsel %vm1066, %v1067, %v1065
    %v1069 = vrsqrt.pop %v1043
    %v1070 = vmul.f32 %v1043, %v1069
    %vm1071 = vcmp.eq.f32.partialorder %v1043, inf
    %v1072 = vsel %vm1071, %v1043, %v1070
    %vm1073 = vcmp.eq.f32.partialorder %v1043, 0.0
    %v1074 = vand.u32 %v1043, 2147483648
    %v1075 = vsel %vm1073, %v1074, %v1072
    %v1076 = vrsqrt.pop %v1044
    %v1077 = vmul.f32 %v1044, %v1076
    %vm1078 = vcmp.eq.f32.partialorder %v1044, inf
    %v1079 = vsel %vm1078, %v1044, %v1077
    %vm1080 = vcmp.eq.f32.partialorder %v1044, 0.0
    %v1081 = vand.u32 %v1044, 2147483648
    %v1082 = vsel %vm1080, %v1081, %v1079
    %v1083 = vrsqrt.pop %v1045
    %v1084 = vmul.f32 %v1045, %v1083
    %vm1085 = vcmp.eq.f32.partialorder %v1045, inf
    %v1086 = vsel %vm1085, %v1045, %v1084
    %vm1087 = vcmp.eq.f32.partialorder %v1045, 0.0
    %v1088 = vand.u32 %v1045, 2147483648
    %v1089 = vsel %vm1087, %v1088, %v1086
    %v1090 = vrsqrt.pop %v1046
    %v1091 = vmul.f32 %v1046, %v1090
    %vm1092 = vcmp.eq.f32.partialorder %v1046, inf
    %v1093 = vsel %vm1092, %v1046, %v1091
    %vm1094 = vcmp.eq.f32.partialorder %v1046, 0.0
    %v1095 = vand.u32 %v1046, 2147483648
    %v1096 = vsel %vm1094, %v1095, %v1093
    %v1097 = vrsqrt.pop %v1047
    %v1098 = vmul.f32 %v1047, %v1097
    %vm1099 = vcmp.eq.f32.partialorder %v1047, inf
    %v1100 = vsel %vm1099, %v1047, %v1098
    %vm1101 = vcmp.eq.f32.partialorder %v1047, 0.0
    %v1102 = vand.u32 %v1047, 2147483648
    %v1103 = vsel %vm1101, %v1102, %v1100
    %v1104 = vld [vmem:[%s1 + $0x3] sm:$0x1]
    %1105 = vset.pattern.permute.xlu0 3
    %1106 = vperm.xlu0 %1105, %v825
    %v1107 = vpop.permute.xlu0 %1106
    %1109 = vset.pattern.permute.xlu0 3
    %1110 = vperm.xlu0 %1109, %v826
    %v1111 = vpop.permute.xlu0 %1110
    %1113 = vset.pattern.permute.xlu0 3
    %1114 = vperm.xlu0 %1113, %v827
    %v1115 = vpop.permute.xlu0 %1114
    %1117 = vset.pattern.permute.xlu0 3
    %1118 = vperm.xlu0 %1117, %v828
    %v1119 = vpop.permute.xlu0 %1118
    %1121 = vset.pattern.permute.xlu0 3
    %1122 = vperm.xlu0 %1121, %v829
    %v1123 = vpop.permute.xlu0 %1122
    %1125 = vset.pattern.permute.xlu0 3
    %1126 = vperm.xlu0 %1125, %v830
    %v1127 = vpop.permute.xlu0 %1126
    %1129 = vset.pattern.permute.xlu0 3
    %1130 = vperm.xlu0 %1129, %v831
    %v1131 = vpop.permute.xlu0 %1130
    %1133 = vset.pattern.permute.xlu0 3
    %1134 = vperm.xlu0 %1133, %v832
    %v1135 = vpop.permute.xlu0 %1134
    %v1137 = vlaneseq
    %v1138 = vshrl.u32 %v1137, 7
    %v1139 = vsub.s32 0, %v1138
    %v1140 = vrot.slane %v1104, %v1139
    %v1141 = vsub.f32 %v1107, %v1140
    %v1142 = vsub.f32 %v1111, %v1140
    %v1143 = vsub.f32 %v1115, %v1140
    %v1144 = vsub.f32 %v1119, %v1140
    %v1145 = vsub.f32 %v1123, %v1140
    %v1146 = vsub.f32 %v1127, %v1140
    %v1147 = vsub.f32 %v1131, %v1140
    %v1148 = vsub.f32 %v1135, %v1140
    %v1149 = vand.u32 2147483647, %v1141
    %v1150 = vand.u32 2147483647, %v1142
    %v1151 = vand.u32 2147483647, %v1143
    %v1152 = vand.u32 2147483647, %v1144
    %v1153 = vand.u32 2147483647, %v1145
    %v1154 = vand.u32 2147483647, %v1146
    %v1155 = vand.u32 2147483647, %v1147
    %v1156 = vand.u32 2147483647, %v1148
    %v1157 = vadd.f32 %v1149, 1e-06
    %v1158 = vadd.f32 %v1150, 1e-06
    %v1159 = vadd.f32 %v1151, 1e-06
    %v1160 = vadd.f32 %v1152, 1e-06
    %v1161 = vadd.f32 %v1153, 1e-06
    %v1162 = vadd.f32 %v1154, 1e-06
    %v1163 = vadd.f32 %v1155, 1e-06
    %v1164 = vadd.f32 %v1156, 1e-06
    %v1165 = vmul.f32 %v1157, %v1157
    %v1166 = vmul.f32 %v1158, %v1158
    %v1167 = vmul.f32 %v1159, %v1159
    %v1168 = vmul.f32 %v1160, %v1160
    %v1169 = vmul.f32 %v1161, %v1161
    %v1170 = vmul.f32 %v1162, %v1162
    %v1171 = vmul.f32 %v1163, %v1163
    %v1172 = vmul.f32 %v1164, %v1164
    %v1173 = vadd.f32 %v1165, 0.0
    %v1174 = vadd.f32 %v1166, 0.0
    %v1175 = vadd.f32 %v1167, 0.0
    %v1176 = vadd.f32 %v1168, 0.0
    %v1177 = vadd.f32 %v1169, 0.0
    %v1178 = vadd.f32 %v1170, 0.0
    %v1179 = vadd.f32 %v1171, 0.0
    %v1180 = vadd.f32 %v1172, 0.0
    %v1181 = vld [vmem:[%s1 + $0x4] sm:$0x1]
    %1182 = vset.pattern.permute.xlu0 4
    %1183 = vperm.xlu0 %1182, %v825
    %v1184 = vpop.permute.xlu0 %1183
    %1186 = vset.pattern.permute.xlu0 4
    %1187 = vperm.xlu0 %1186, %v826
    %v1188 = vpop.permute.xlu0 %1187
    %1190 = vset.pattern.permute.xlu0 4
    %1191 = vperm.xlu0 %1190, %v827
    %v1192 = vpop.permute.xlu0 %1191
    %1194 = vset.pattern.permute.xlu0 4
    %1195 = vperm.xlu0 %1194, %v828
    %v1196 = vpop.permute.xlu0 %1195
    %1198 = vset.pattern.permute.xlu0 4
    %1199 = vperm.xlu0 %1198, %v829
    %v1200 = vpop.permute.xlu0 %1199
    %1202 = vset.pattern.permute.xlu0 4
    %1203 = vperm.xlu0 %1202, %v830
    %v1204 = vpop.permute.xlu0 %1203
    %1206 = vset.pattern.permute.xlu0 4
    %1207 = vperm.xlu0 %1206, %v831
    %v1208 = vpop.permute.xlu0 %1207
    %1210 = vset.pattern.permute.xlu0 4
    %1211 = vperm.xlu0 %1210, %v832
    %v1212 = vpop.permute.xlu0 %1211
    %v1214 = vlaneseq
    %v1215 = vshrl.u32 %v1214, 7
    %v1216 = vsub.s32 0, %v1215
    %v1217 = vrot.slane %v1181, %v1216
    %v1218 = vsub.f32 %v1184, %v1217
    %v1219 = vsub.f32 %v1188, %v1217
    %v1220 = vsub.f32 %v1192, %v1217
    %v1221 = vsub.f32 %v1196, %v1217
    %v1222 = vsub.f32 %v1200, %v1217
    %v1223 = vsub.f32 %v1204, %v1217
    %v1224 = vsub.f32 %v1208, %v1217
    %v1225 = vsub.f32 %v1212, %v1217
    %v1226 = vand.u32 2147483647, %v1218
    %v1227 = vand.u32 2147483647, %v1219
    %v1228 = vand.u32 2147483647, %v1220
    %v1229 = vand.u32 2147483647, %v1221
    %v1230 = vand.u32 2147483647, %v1222
    %v1231 = vand.u32 2147483647, %v1223
    %v1232 = vand.u32 2147483647, %v1224
    %v1233 = vand.u32 2147483647, %v1225
    %v1234 = vadd.f32 %v1226, 1e-06
    %v1235 = vadd.f32 %v1227, 1e-06
    %v1236 = vadd.f32 %v1228, 1e-06
    %v1237 = vadd.f32 %v1229, 1e-06
    %v1238 = vadd.f32 %v1230, 1e-06
    %v1239 = vadd.f32 %v1231, 1e-06
    %v1240 = vadd.f32 %v1232, 1e-06
    %v1241 = vadd.f32 %v1233, 1e-06
    %v1242 = vmul.f32 %v1234, %v1234
    %v1243 = vmul.f32 %v1235, %v1235
    %v1244 = vmul.f32 %v1236, %v1236
    %v1245 = vmul.f32 %v1237, %v1237
    %v1246 = vmul.f32 %v1238, %v1238
    %v1247 = vmul.f32 %v1239, %v1239
    %v1248 = vmul.f32 %v1240, %v1240
    %v1249 = vmul.f32 %v1241, %v1241
    %v1250 = vadd.f32 %v1173, %v1242
    %v1251 = vadd.f32 %v1174, %v1243
    %v1252 = vadd.f32 %v1175, %v1244
    %v1253 = vadd.f32 %v1176, %v1245
    %v1254 = vadd.f32 %v1177, %v1246
    %v1255 = vadd.f32 %v1178, %v1247
    %v1256 = vadd.f32 %v1179, %v1248
    %v1257 = vadd.f32 %v1180, %v1249
    %v1258 = vld [vmem:[%s1 + $0x5] sm:$0x1]
    %1259 = vset.pattern.permute.xlu0 5
    %1260 = vperm.xlu0 %1259, %v825
    %v1261 = vpop.permute.xlu0 %1260
    %1263 = vset.pattern.permute.xlu0 5
    %1264 = vperm.xlu0 %1263, %v826
    %v1265 = vpop.permute.xlu0 %1264
    %1267 = vset.pattern.permute.xlu0 5
    %1268 = vperm.xlu0 %1267, %v827
    %v1269 = vpop.permute.xlu0 %1268
    %1271 = vset.pattern.permute.xlu0 5
    %1272 = vperm.xlu0 %1271, %v828
    %v1273 = vpop.permute.xlu0 %1272
    %1275 = vset.pattern.permute.xlu0 5
    %1276 = vperm.xlu0 %1275, %v829
    %v1277 = vpop.permute.xlu0 %1276
    %1279 = vset.pattern.permute.xlu0 5
    %1280 = vperm.xlu0 %1279, %v830
    %v1281 = vpop.permute.xlu0 %1280
    %1283 = vset.pattern.permute.xlu0 5
    %1284 = vperm.xlu0 %1283, %v831
    %v1285 = vpop.permute.xlu0 %1284
    %1287 = vset.pattern.permute.xlu0 5
    %1288 = vperm.xlu0 %1287, %v832
    %v1289 = vpop.permute.xlu0 %1288
    %v1291 = vlaneseq
    %v1292 = vshrl.u32 %v1291, 7
    %v1293 = vsub.s32 0, %v1292
    %v1294 = vrot.slane %v1258, %v1293
    %v1295 = vsub.f32 %v1261, %v1294
    %v1296 = vsub.f32 %v1265, %v1294
    %v1297 = vsub.f32 %v1269, %v1294
    %v1298 = vsub.f32 %v1273, %v1294
    %v1299 = vsub.f32 %v1277, %v1294
    %v1300 = vsub.f32 %v1281, %v1294
    %v1301 = vsub.f32 %v1285, %v1294
    %v1302 = vsub.f32 %v1289, %v1294
    %v1303 = vand.u32 2147483647, %v1295
    %v1304 = vand.u32 2147483647, %v1296
    %v1305 = vand.u32 2147483647, %v1297
    %v1306 = vand.u32 2147483647, %v1298
    %v1307 = vand.u32 2147483647, %v1299
    %v1308 = vand.u32 2147483647, %v1300
    %v1309 = vand.u32 2147483647, %v1301
    %v1310 = vand.u32 2147483647, %v1302
    %v1311 = vadd.f32 %v1303, 1e-06
    %v1312 = vadd.f32 %v1304, 1e-06
    %v1313 = vadd.f32 %v1305, 1e-06
    %v1314 = vadd.f32 %v1306, 1e-06
    %v1315 = vadd.f32 %v1307, 1e-06
    %v1316 = vadd.f32 %v1308, 1e-06
    %v1317 = vadd.f32 %v1309, 1e-06
    %v1318 = vadd.f32 %v1310, 1e-06
    %v1319 = vmul.f32 %v1311, %v1311
    %v1320 = vmul.f32 %v1312, %v1312
    %v1321 = vmul.f32 %v1313, %v1313
    %v1322 = vmul.f32 %v1314, %v1314
    %v1323 = vmul.f32 %v1315, %v1315
    %v1324 = vmul.f32 %v1316, %v1316
    %v1325 = vmul.f32 %v1317, %v1317
    %v1326 = vmul.f32 %v1318, %v1318
    %v1327 = vadd.f32 %v1250, %v1319
    %v1328 = vadd.f32 %v1251, %v1320
    %v1329 = vadd.f32 %v1252, %v1321
    %v1330 = vadd.f32 %v1253, %v1322
    %v1331 = vadd.f32 %v1254, %v1323
    %v1332 = vadd.f32 %v1255, %v1324
    %v1333 = vadd.f32 %v1256, %v1325
    %v1334 = vadd.f32 %v1257, %v1326
    %v1335 = vrsqrt.pop %v1327
    %v1336 = vmul.f32 %v1327, %v1335
    %vm1337 = vcmp.eq.f32.partialorder %v1327, inf
    %v1338 = vsel %vm1337, %v1327, %v1336
    %vm1339 = vcmp.eq.f32.partialorder %v1327, 0.0
    %v1340 = vand.u32 %v1327, 2147483648
    %v1341 = vsel %vm1339, %v1340, %v1338
    %v1342 = vrsqrt.pop %v1328
    %v1343 = vmul.f32 %v1328, %v1342
    %vm1344 = vcmp.eq.f32.partialorder %v1328, inf
    %v1345 = vsel %vm1344, %v1328, %v1343
    %vm1346 = vcmp.eq.f32.partialorder %v1328, 0.0
    %v1347 = vand.u32 %v1328, 2147483648
    %v1348 = vsel %vm1346, %v1347, %v1345
    %v1349 = vrsqrt.pop %v1329
    %v1350 = vmul.f32 %v1329, %v1349
    %vm1351 = vcmp.eq.f32.partialorder %v1329, inf
    %v1352 = vsel %vm1351, %v1329, %v1350
    %vm1353 = vcmp.eq.f32.partialorder %v1329, 0.0
    %v1354 = vand.u32 %v1329, 2147483648
    %v1355 = vsel %vm1353, %v1354, %v1352
    %v1356 = vrsqrt.pop %v1330
    %v1357 = vmul.f32 %v1330, %v1356
    %vm1358 = vcmp.eq.f32.partialorder %v1330, inf
    %v1359 = vsel %vm1358, %v1330, %v1357
    %vm1360 = vcmp.eq.f32.partialorder %v1330, 0.0
    %v1361 = vand.u32 %v1330, 2147483648
    %v1362 = vsel %vm1360, %v1361, %v1359
    %v1363 = vrsqrt.pop %v1331
    %v1364 = vmul.f32 %v1331, %v1363
    %vm1365 = vcmp.eq.f32.partialorder %v1331, inf
    %v1366 = vsel %vm1365, %v1331, %v1364
    %vm1367 = vcmp.eq.f32.partialorder %v1331, 0.0
    %v1368 = vand.u32 %v1331, 2147483648
    %v1369 = vsel %vm1367, %v1368, %v1366
    %v1370 = vrsqrt.pop %v1332
    %v1371 = vmul.f32 %v1332, %v1370
    %vm1372 = vcmp.eq.f32.partialorder %v1332, inf
    %v1373 = vsel %vm1372, %v1332, %v1371
    %vm1374 = vcmp.eq.f32.partialorder %v1332, 0.0
    %v1375 = vand.u32 %v1332, 2147483648
    %v1376 = vsel %vm1374, %v1375, %v1373
    %v1377 = vrsqrt.pop %v1333
    %v1378 = vmul.f32 %v1333, %v1377
    %vm1379 = vcmp.eq.f32.partialorder %v1333, inf
    %v1380 = vsel %vm1379, %v1333, %v1378
    %vm1381 = vcmp.eq.f32.partialorder %v1333, 0.0
    %v1382 = vand.u32 %v1333, 2147483648
    %v1383 = vsel %vm1381, %v1382, %v1380
    %v1384 = vrsqrt.pop %v1334
    %v1385 = vmul.f32 %v1334, %v1384
    %vm1386 = vcmp.eq.f32.partialorder %v1334, inf
    %v1387 = vsel %vm1386, %v1334, %v1385
    %vm1388 = vcmp.eq.f32.partialorder %v1334, 0.0
    %v1389 = vand.u32 %v1334, 2147483648
    %v1390 = vsel %vm1388, %v1389, %v1387
    %vm1391 = vcmp.ge.f32.partialorder %v1054, 0.5
    %vm1392 = vcmp.ge.f32.partialorder %v1061, 0.5
    %vm1393 = vcmp.ge.f32.partialorder %v1068, 0.5
    %vm1394 = vcmp.ge.f32.partialorder %v1075, 0.5
    %vm1395 = vcmp.ge.f32.partialorder %v1082, 0.5
    %vm1396 = vcmp.ge.f32.partialorder %v1089, 0.5
    %vm1397 = vcmp.ge.f32.partialorder %v1096, 0.5
    %vm1398 = vcmp.ge.f32.partialorder %v1103, 0.5
    %v1399 = vmul.f32 %v1054, -2.0
    %v1400 = vmul.f32 %v1061, -2.0
    %v1401 = vmul.f32 %v1068, -2.0
    %v1402 = vmul.f32 %v1075, -2.0
    %v1403 = vmul.f32 %v1082, -2.0
    %v1404 = vmul.f32 %v1089, -2.0
    %v1405 = vmul.f32 %v1096, -2.0
    %v1406 = vmul.f32 %v1103, -2.0
    %v1407 = vmul.f32 %v1399, 1.442695
    %v1408 = vpow.pop %v1407
    %v1409 = vmul.f32 %v1400, 1.442695
    %v1410 = vpow.pop %v1409
    %v1411 = vmul.f32 %v1401, 1.442695
    %v1412 = vpow.pop %v1411
    %v1413 = vmul.f32 %v1402, 1.442695
    %v1414 = vpow.pop %v1413
    %v1415 = vmul.f32 %v1403, 1.442695
    %v1416 = vpow.pop %v1415
    %v1417 = vmul.f32 %v1404, 1.442695
    %v1418 = vpow.pop %v1417
    %v1419 = vmul.f32 %v1405, 1.442695
    %v1420 = vpow.pop %v1419
    %v1421 = vmul.f32 %v1406, 1.442695
    %v1422 = vpow.pop %v1421
    %v1423 = vsel %vm1391, 0.0, %v1408
    %v1424 = vsel %vm1392, 0.0, %v1410
    %v1425 = vsel %vm1393, 0.0, %v1412
    %v1426 = vsel %vm1394, 0.0, %v1414
    %v1427 = vsel %vm1395, 0.0, %v1416
    %v1428 = vsel %vm1396, 0.0, %v1418
    %v1429 = vsel %vm1397, 0.0, %v1420
    %v1430 = vsel %vm1398, 0.0, %v1422
    %v1431 = vmul.f32 %v1341, %v1423
    %v1432 = vmul.f32 %v1348, %v1424
    %v1433 = vmul.f32 %v1355, %v1425
    %v1434 = vmul.f32 %v1362, %v1426
    %v1435 = vmul.f32 %v1369, %v1427
    %v1436 = vmul.f32 %v1376, %v1428
    %v1437 = vmul.f32 %v1383, %v1429
    %v1438 = vmul.f32 %v1390, %v1430
    %vm1439 = vcmask 523264
    %v1440 = vsel %vm1439, %v1431, 0.0
    %v1441 = vsel %vm1439, %v1432, 0.0
    %v1442 = vadd.f32 %v1440, %v1441
    %v1443 = vsel %vm1439, %v1433, 0.0
    %v1444 = vadd.f32 %v1442, %v1443
    %v1445 = vsel %vm1439, %v1434, 0.0
    %v1446 = vadd.f32 %v1444, %v1445
    %v1447 = vsel %vm1439, %v1435, 0.0
    %v1448 = vadd.f32 %v1446, %v1447
    %v1449 = vsel %vm1439, %v1436, 0.0
    %v1450 = vadd.f32 %v1448, %v1449
    %v1451 = vsel %vm1439, %v1437, 0.0
    %v1452 = vadd.f32 %v1450, %v1451
    %v1453 = vsel %vm1439, %v1438, 0.0
    %v1454 = vadd.f32 %v1452, %v1453
    %1455 = vadd.xlane.f32.xlu0 %v1454
    %v1456 = vpop.xlane.xlu0 %1455
    %v1457 = vrot.slane %v1456, 4
    %v1458 = vadd.f32 %v1456, %v1457
    %v1459 = vrot.slane %v1458, 2
    %v1460 = vadd.f32 %v1458, %v1459
    %v1461 = vrot.slane %v1460, 1
    %v1462 = vadd.f32 %v1460, %v1461
    %s1463 = vtos %v1462
    %v1464 = vrcp.pop 64.0
    %s1465 = vtos %v1464
    %s1466 = smul.f32 %s1463, %s1465
    %v1467 = vld [vmem:[%s1 + $0x6] sm:$0x7]
    %v1468 = vld [vmem:[%s1] sm:$0x7]
    %v1469 = vsub.f32 %v1467, %v1468
    %v1470 = vmul.f32 %v1469, %v1469
    %vm1471 = vcmask 518144
    %v1472 = vsel %vm1471, %v1470, 0.0
    %1473 = vadd.xlane.f32.xlu0 %v1472
    %v1474 = vpop.xlane.xlu0 %1473
    %v1475 = vrot.slane %v1474, 4
    %v1476 = vadd.f32 %v1474, %v1475
    %v1477 = vrot.slane %v1476, 2
    %v1478 = vadd.f32 %v1476, %v1477
    %v1479 = vrot.slane %v1478, 1
    %v1480 = vadd.f32 %v1478, %v1479
    %s1481 = vtos %v1480
    %v1482 = vrcp.pop 192.0
    %s1483 = vtos %v1482
    %s1484 = smul.f32 %s1481, %s1483
    %v1485 = vld [vmem:[%s1 + $0x9] sm:$0x1]
    %v1486 = vld [vmem:[%s1 + $0xa] sm:$0x1]
    %v1487 = vld [vmem:[%s1 + $0xb] sm:$0x1]
    %vm1488 = vcmask 516096
    %v1489 = vsel %vm1488, %v1485, 0.0
    %1490 = vadd.xlane.f32.xlu0 %v1489
    %v1491 = vpop.xlane.xlu0 %1490
    %v1492 = vrot.slane %v1491, 4
    %v1493 = vadd.f32 %v1491, %v1492
    %v1494 = vrot.slane %v1493, 2
    %v1495 = vadd.f32 %v1493, %v1494
    %v1496 = vrot.slane %v1495, 1
    %v1497 = vadd.f32 %v1495, %v1496
    %s1498 = vtos %v1497
    %v1499 = vrcp.pop 64.0
    %s1500 = vtos %v1499
    %s1501 = smul.f32 %s1498, %s1500
    %v1502 = vstv %s1501
    %v1503 = vsub.f32 %v1485, %v1502
    %v1504 = vmul.f32 %v1503, %v1503
    %v1505 = vsel %vm1488, %v1504, 0.0
    %1506 = vadd.xlane.f32.xlu0 %v1505
    %v1507 = vpop.xlane.xlu0 %1506
    %v1508 = vrot.slane %v1507, 4
    %v1509 = vadd.f32 %v1507, %v1508
    %v1510 = vrot.slane %v1509, 2
    %v1511 = vadd.f32 %v1509, %v1510
    %v1512 = vrot.slane %v1511, 1
    %v1513 = vadd.f32 %v1511, %v1512
    %s1514 = vtos %v1513
    %v1515 = vrcp.pop 64.0
    %s1516 = vtos %v1515
    %s1517 = smul.f32 %s1514, %s1516
    %v1518 = vsel %vm1488, %v1487, 0.0
    %1519 = vadd.xlane.f32.xlu0 %v1518
    %v1520 = vpop.xlane.xlu0 %1519
    %v1521 = vrot.slane %v1520, 4
    %v1522 = vadd.f32 %v1520, %v1521
    %v1523 = vrot.slane %v1522, 2
    %v1524 = vadd.f32 %v1522, %v1523
    %v1525 = vrot.slane %v1524, 1
    %v1526 = vadd.f32 %v1524, %v1525
    %s1527 = vtos %v1526
    %v1528 = vrcp.pop 64.0
    %s1529 = vtos %v1528
    %s1530 = smul.f32 %s1527, %s1529
    %v1531 = vstv %s1530
    %v1532 = vsub.f32 %v1487, %v1531
    %v1533 = vmul.f32 %v1532, %v1532
    %v1534 = vsel %vm1488, %v1533, 0.0
    %1535 = vadd.xlane.f32.xlu0 %v1534
    %v1536 = vpop.xlane.xlu0 %1535
    %v1537 = vrot.slane %v1536, 4
    %v1538 = vadd.f32 %v1536, %v1537
    %v1539 = vrot.slane %v1538, 2
    %v1540 = vadd.f32 %v1538, %v1539
    %v1541 = vrot.slane %v1540, 1
    %v1542 = vadd.f32 %v1540, %v1541
    %s1543 = vtos %v1542
    %v1544 = vrcp.pop 64.0
    %s1545 = vtos %v1544
    %s1546 = smul.f32 %s1543, %s1545
    %v1547 = vmul.f32 %v1486, %v1486
    %v1548 = vsel %vm1488, %v1547, 0.0
    %1549 = vadd.xlane.f32.xlu0 %v1548
    %v1550 = vpop.xlane.xlu0 %1549
    %v1551 = vrot.slane %v1550, 4
    %v1552 = vadd.f32 %v1550, %v1551
    %v1553 = vrot.slane %v1552, 2
    %v1554 = vadd.f32 %v1552, %v1553
    %v1555 = vrot.slane %v1554, 1
    %v1556 = vadd.f32 %v1554, %v1555
    %s1557 = vtos %v1556
    %v1558 = vrcp.pop 64.0
    %s1559 = vtos %v1558
    %s1560 = smul.f32 %s1557, %s1559
    %v1561 = vlaneseq
    %v1562 = vand.u32 %v1561, 127
    %vm1563 = vcmp.eq.s32.totalorder %v1562, 0
    %v1564 = vstv %s101
    %v1565 = vsel %vm1563, %v1564, 0.0
    %vm1566 = vcmp.eq.s32.totalorder %v1562, 1
    %v1567 = vstv %s204
    %v1568 = vsel %vm1566, %v1567, %v1565
    %vm1569 = vcmp.eq.s32.totalorder %v1562, 2
    %v1570 = vstv %s256
    %v1571 = vsel %vm1569, %v1570, %v1568
    %vm1572 = vcmp.eq.s32.totalorder %v1562, 3
    %v1573 = vstv %s824
    %v1574 = vsel %vm1572, %v1573, %v1571
    %vm1575 = vcmp.eq.s32.totalorder %v1562, 4
    %v1576 = vstv %s1466
    %v1577 = vsel %vm1575, %v1576, %v1574
    %vm1578 = vcmp.eq.s32.totalorder %v1562, 5
    %v1579 = vstv %s1484
    %v1580 = vsel %vm1578, %v1579, %v1577
    %vm1581 = vcmp.eq.s32.totalorder %v1562, 6
    %v1582 = vstv %s138
    %v1583 = vsel %vm1581, %v1582, %v1580
    %vm1584 = vcmp.eq.s32.totalorder %v1562, 7
    %v1585 = vstv %s1517
    %v1586 = vsel %vm1584, %v1585, %v1583
    %vm1587 = vcmp.eq.s32.totalorder %v1562, 8
    %v1588 = vstv %s1546
    %v1589 = vsel %vm1587, %v1588, %v1586
    %vm1590 = vcmp.eq.s32.totalorder %v1562, 9
    %v1591 = vstv %s1560
    %v1592 = vsel %vm1590, %v1591, %v1589
    %1593 = vst [vmem:[#allocation2] sm:$0x1] %v1592
    // Predicated region
    $region22: #{tpu_custom_call.1} parent=1 // pred_check
      _
    $region23: #{tpu_custom_call.1} parent=1 // pred_check_branch
      %1595 = sbr.rel (0) target = $region25
    $region24: #{tpu_custom_call.1} parent=1 // pred_region
      %s1597 = ssub.s32 16, 16
      %1598 = vsyncadd [#allocation3], %s1597
      %s1600 = sshll.u32 [#allocation2], 4
      %s1601 = int_to_ptr.vmem [resolvable:$true] %s1600
      %1603 = dma.vmem_to_hbm [thread:$0]  %s1601, 16, %s5, [#allocation3]
    $region25: #{tpu_custom_call.1} parent=1 // pred_fallthru
      _
    // Predicated region
    $region26: #{tpu_custom_call.1} parent=1 // pred_check
      _
    $region27: #{tpu_custom_call.1} parent=1 // pred_check_branch
      %1605 = sbr.rel (0) target = $region29
    $region28: #{tpu_custom_call.1} parent=1 // pred_region
      %1606 = dma.done [#allocation3], 16
    $region29: #{tpu_custom_call.1} parent=1 // pred_fallthru
      _
    %1607 = vsyncpa [#allocation3], 1

</llo_original>
